<compile_context>
chip_gen: v6e
topology: v6e:2x2x1
jax: 0.10.0
libtpu: 0.0.40
codegen_flags: <defaults>
</compile_context>

<pallas_src>
import functools

import jax
import jax.numpy as jnp
from jax import lax
from jax.experimental import pallas as pl
from jax.experimental.pallas import tpu as pltpu


def _round_up(x, m):
    return (x + m - 1) // m * m


# ----------------------------------------------------------------------------
# Fully fused encoder kernel (all temporal blocks in one grid step)
# ----------------------------------------------------------------------------

def _fused_encoder_kernel(*refs, block_meta, kernel_size, dilations, tile_l):
    """One grid step = one (batch row, L-tile) through ALL temporal blocks.

    refs (in order):
      x_ref                       : (1, T, C0)   input tile
      per block i:
        w1 (K, Cin, Cout), b1 (1, Cout), w2 (K, Cout, Cout), b2 (1, Cout),
        [wr (Cin, Cout), br (1, Cout)]            (if Cin != Cout)
      per block i: out_ref_i      : (1, T, C_i)
      per block i: win_x (hp+T, Cin) f32, win_h (hp+T, Cout) f32   VMEM scratch
                   (persistent causal windows; rows [hp-halo, hp) carry the tail of
                    the previous L-tile, rows [hp, hp+T) hold the current tile)
    """
    K = kernel_size
    T = tile_l
    nb = len(block_meta)

    idx = 0
    x_ref = refs[idx]
    idx += 1
    blk_w = []
    for (_, _, has_res) in block_meta:
        n = 6 if has_res else 4
        blk_w.append(refs[idx:idx + n])
        idx += n
    out_refs = refs[idx:idx + nb]
    idx += nb
    scratch = refs[idx:]
    assert len(scratch) == 2 * nb

    t = pl.program_id(1)

    cur = x_ref[0].astype(jnp.float32)                       # (T, C0)

    for i, (cin, cout, has_res) in enumerate(block_meta):
        d = dilations[i]
        halo = (K - 1) * d
        hp = _round_up(halo, 8)                              # 8-aligned tile offset
        win_x = scratch[2 * i]                               # (hp+T, cin)  f32
        win_h = scratch[2 * i + 1]                           # (hp+T, cout) f32
        if has_res:
            w1, b1, w2, b2, wr, br = blk_w[i]
        else:
            w1, b1, w2, b2 = blk_w[i]
            wr = br = None

        # Causal left padding: zero this block's carry region at the first L-tile
        # of every batch row.
        @pl.when(t == 0)
        def _(win_x=win_x, win_h=win_h, lo=hp - halo, halo=halo):
            win_x[lo:lo + halo, :] = jnp.zeros((halo, win_x.shape[1]), win_x.dtype)
            win_h[lo:lo + halo, :] = jnp.zeros((halo, win_h.shape[1]), win_h.dtype)

        # ---- conv1 (+ReLU): K dilated taps read directly from the window ----
        win_x[hp:hp + T, :] = cur                            # 8-aligned store
        h = b1[...].astype(jnp.float32)                      # (1, cout) broadcasts
        for k in range(K):
            off = hp - halo + k * d
            h = h + jnp.dot(win_x[off:off + T, :], w1[k].astype(jnp.float32),
                            preferred_element_type=jnp.float32)
        h = jnp.maximum(h, 0.0)                              # (T, cout)

        # ---- conv2 on h (its own causal window / carry) ----
        win_h[hp:hp + T, :] = h
        y = b2[...].astype(jnp.float32)
        for k in range(K):
            off = hp - halo + k * d
            y = y + jnp.dot(win_h[off:off + T, :], w2[k].astype(jnp.float32),
                            preferred_element_type=jnp.float32)

        # ---- residual path (1x1 conv if channel counts differ, else identity) ----
        if has_res:
            res = jnp.dot(cur, wr[...].astype(jnp.float32),
                          preferred_element_type=jnp.float32)
            res = res + br[...].astype(jnp.float32)
        else:
            res = cur

        out = jnp.maximum(y + res, 0.0)                      # (T, cout) f32

        # ---- carry the last `halo` rows for the next L-tile ----
        # (read into temps before storing so this is correct even if T < halo)
        x_tail = win_x[hp + T - halo:hp + T, :]
        h_tail = win_h[hp + T - halo:hp + T, :]
        win_x[hp - halo:hp, :] = x_tail
        win_h[hp - halo:hp, :] = h_tail

        # TODO(synk): with Cout=8 this store is lane-masked (8/128 lanes); at
        # production channel counts pad C to a 128-multiple or emit a lane-dense
        # (C, L)-major layout; at these tiny C a channels-on-sublane / L-on-lane
        # VPU formulation would use full lanes.
        out_refs[i][0] = out.astype(out_refs[i].dtype)

        cur = out                                            # feed next block (f32)


# ----------------------------------------------------------------------------
# Wrapper: ONE pallas_call for the whole encoder
# ----------------------------------------------------------------------------

def _pick_tile_l(L, block_meta, K, dilations, *, cap=4096,
                 budget_bytes=20 * 1024 * 1024):
    """Largest multiple-of-8 L-tile (<= cap) whose VMEM footprint stays in budget."""
    def vmem_estimate(T):
        total = 2 * T * block_meta[0][0] * 4                 # x, double-buffered
        for (cin, cout, _), d in zip(block_meta, dilations):
            hp = _round_up((K - 1) * d, 8)
            total += 2 * T * cout * 4                        # out, double-buffered
            total += (hp + T) * (cin + cout) * 4             # f32 carry windows
        return total

    tile = min(_round_up(L, 8), _round_up(cap, 8))
    while tile > 8 and vmem_estimate(tile) > budget_bytes:
        tile -= 8
    return max(tile, 8)


def encoder_forward(x_ncl, params, kernel_size, dilations, *, tile_l=None,
                    io_dtype=None, vmem_limit_bytes=32 * 1024 * 1024):
    """x_ncl: (B, C_in, L) in the PyTorch NCL convention.

    Returns {'features': (B, L, C_last), 'block_outputs': [(B, L, C_i), ...]},
    matching the PyTorch Encoder output after its transpose(1, 2) calls.
    """
    B, C0, L = x_ncl.shape
    K = kernel_size
    nb = len(params)
    assert nb == len(dilations)

    # Static per-block metadata.
    block_meta = []
    cin = C0
    for blk in params:
        cout = blk["w1"].shape[-1]
        block_meta.append((cin, cout, "w_res" in blk))
        cin = cout
    block_meta = tuple(block_meta)

    x = jnp.transpose(x_ncl, (0, 2, 1))                      # NCL -> NLC
    if io_dtype is not None:
        x = x.astype(io_dtype)
    dtype = x.dtype

    if tile_l is None:
        tile_l = _pick_tile_l(L, block_meta, K, dilations)
    assert tile_l % 8 == 0 and tile_l > 0

    # Ragged L: pad up to a tile multiple (causal conv -> padding at the end never
    # touches valid rows), slice the outputs back afterwards.
    L_pad = _round_up(L, tile_l)
    if L_pad != L:
        x = jnp.pad(x, ((0, 0), (0, L_pad - L), (0, 0)))
    nt = L_pad // tile_l

    inputs = [x]
    in_specs = [pl.BlockSpec((1, tile_l, C0), lambda b, t: (b, t, 0))]
    scratch_shapes = []
    out_shapes = []
    out_specs = []

    def _const3(b, t):
        return (0, 0, 0)

    def _const2(b, t):
        return (0, 0)

    for (cin_i, cout_i, has_res), blk, d in zip(block_meta, params, dilations):
        arrs = [blk["w1"], blk["b1"].reshape(1, cout_i),
                blk["w2"], blk["b2"].reshape(1, cout_i)]
        specs = [pl.BlockSpec((K, cin_i, cout_i), _const3),   # resident weights
                 pl.BlockSpec((1, cout_i), _const2),
                 pl.BlockSpec((K, cout_i, cout_i), _const3),
                 pl.BlockSpec((1, cout_i), _const2)]
        if has_res:
            arrs += [blk["w_res"].reshape(cin_i, cout_i),
                     blk["b_res"].reshape(1, cout_i)]
            specs += [pl.BlockSpec((cin_i, cout_i), _const2),
                      pl.BlockSpec((1, cout_i), _const2)]
        if io_dtype is not None:
            arrs = [a.astype(io_dtype) for a in arrs]         # bf16 HBM I/O
        inputs += arrs
        in_specs += specs

        hp = _round_up((K - 1) * d, 8)
        scratch_shapes += [pltpu.VMEM((hp + tile_l, cin_i), jnp.float32),
                           pltpu.VMEM((hp + tile_l, cout_i), jnp.float32)]
        out_shapes.append(jax.ShapeDtypeStruct((B, L_pad, cout_i), dtype))
        out_specs.append(pl.BlockSpec((1, tile_l, cout_i), lambda b, t: (b, t, 0)))

    kernel = functools.partial(_fused_encoder_kernel, block_meta=block_meta,
                               kernel_size=K, dilations=tuple(dilations),
                               tile_l=tile_l)

    outs = pl.pallas_call(
        kernel,
        out_shape=tuple(out_shapes),
        grid=(B, nt),
        in_specs=in_specs,
        out_specs=tuple(out_specs),
        scratch_shapes=scratch_shapes,
        compiler_params=pltpu.CompilerParams(
            # INVARIANT: the L axis must stay the innermost grid axis and remain
            # "arbitrary" (sequential) -- the per-block carry windows assume
            # t = 0..nt-1 runs in order for each batch row.  B may be parallel.
            dimension_semantics=("parallel", "arbitrary"),
            vmem_limit_bytes=vmem_limit_bytes),
    )(*inputs)

    if L_pad != L:
        outs = tuple(o[:, :L, :] for o in outs)

    # TODO(synk): for single/odd-batch inference on v7x (2 TCs), split L across
    # cores with HBM halo reads instead of the sequential carry; on single-TC
    # v5e/v6e, folding several batch rows per grid step would enlarge the per-step
    # DMAs.  A pipeline_mode=pl.Buffered(3) sweep on the x/out specs is another
    # cheap knob.  use_skip_connections / norm variants of the module are not
    # modeled (weight-norm folds into weights; dropout is identity in eval).
    return {"features": outs[-1], "block_outputs": list(outs)}


# ----------------------------------------------------------------------------
# Parameter construction (shapes match the PyTorch module's __init__)
# ----------------------------------------------------------------------------

def init_encoder_params(key, num_inputs, channels, kernel_size, dilations):
    """Deterministic synthetic weights; weight-norm is folded into the weights."""
    params = []
    c_in = num_inputs
    for c_out, _ in zip(channels, dilations):
        k0, k1, k2, key = jax.random.split(key, 4)
        scale1 = 1.0 / jnp.sqrt(c_in * kernel_size)
        scale2 = 1.0 / jnp.sqrt(c_out * kernel_size)
        blk = {
            "w1": jax.random.normal(k0, (kernel_size, c_in, c_out), jnp.float32) * scale1,
            "b1": jnp.zeros((c_out,), jnp.float32),
            "w2": jax.random.normal(k1, (kernel_size, c_out, c_out), jnp.float32) * scale2,
            "b2": jnp.zeros((c_out,), jnp.float32),
        }
        if c_in != c_out:
            blk["w_res"] = jax.random.normal(k2, (1, c_in, c_out), jnp.float32) / jnp.sqrt(c_in)
            blk["b_res"] = jnp.zeros((c_out,), jnp.float32)
        params.append(blk)
        c_in = c_out
    return params


# ----------------------------------------------------------------------------
# Pure-JAX reference (correctness check only)
# ----------------------------------------------------------------------------

def _ref_conv(x_nlc, w, b, dilation, apply_relu):
    K = w.shape[0]
    y = lax.conv_general_dilated(
        x_nlc, w, window_strides=(1,), padding=[((K - 1) * dilation, 0)],
        rhs_dilation=(dilation,), dimension_numbers=("NWC", "WIO", "NWC"))
    y = y + b.reshape(1, 1, -1)
    return jnp.maximum(y, 0.0) if apply_relu else y


def _ref_forward(x_ncl, params, dilations):
    x = jnp.transpose(x_ncl, (0, 2, 1))
    outs = []
    for blk, d in zip(params, dilations):
        h = _ref_conv(x, blk["w1"], blk["b1"], d, True)
        h = _ref_conv(h, blk["w2"], blk["b2"], d, False)
        res = _ref_conv(x, blk["w_res"], blk["b_res"], 1, False) if "w_res" in blk else x
        x = jnp.maximum(h + res, 0.0)
        outs.append(x)
    return {"features": x, "block_outputs": outs}


# ----------------------------------------------------------------------------
# Main
# ----------------------------------------------------------------------------

if __name__ == "__main__":
    # Module config (synthetic, small): num_input_channels=4,
    # encoder_embedding_sizes=[8, 8], encoder_kernel_size=3, encoder_dilations=[1, 2],
    # causal=True, activation=relu.
    B, C_IN, L = 2, 4, 16
    CHANNELS = [8, 8]
    KERNEL_SIZE = 3
    DILATIONS = [1, 2]

    key = jax.random.PRNGKey(0)
    k_x, k_w = jax.random.split(key)
    x = jax.random.normal(k_x, (B, C_IN, L), jnp.float32)   # PyTorch NCL input
    params = init_encoder_params(k_w, C_IN, CHANNELS, KERNEL_SIZE, DILATIONS)
    ref = _ref_forward(x, params, DILATIONS)

    # 1) multi-tile path (tile_l=8 -> 2 L-tiles): exercises the causal carry
    #    windows across tile boundaries (incl. dilation=2 in the second block).
    fwd = jax.jit(functools.partial(encoder_forward, kernel_size=KERNEL_SIZE,
                                    dilations=DILATIONS, tile_l=8))
    out = fwd(x, params)
    jax.block_until_ready(out["features"])
    assert out["features"].shape == (B, L, CHANNELS[-1])
    assert jnp.allclose(out["features"], ref["features"], rtol=1e-4, atol=1e-4)
    for a, b in zip(out["block_outputs"], ref["block_outputs"]):
        assert jnp.allclose(a, b, rtol=1e-4, atol=1e-4)

    # 2) auto tile picker (single-tile path).
    out2 = jax.jit(functools.partial(encoder_forward, kernel_size=KERNEL_SIZE,
                                     dilations=DILATIONS))(x, params)
    jax.block_until_ready(out2["features"])
    assert jnp.allclose(out2["features"], ref["features"], rtol=1e-4, atol=1e-4)

    # 3) ragged L (L=12 not a multiple of tile_l=8): exercises the padding path.
    x12 = x[:, :, :12]
    ref12 = _ref_forward(x12, params, DILATIONS)
    out3 = jax.jit(functools.partial(encoder_forward, kernel_size=KERNEL_SIZE,
                                     dilations=DILATIONS, tile_l=8))(x12, params)
    jax.block_until_ready(out3["features"])
    assert out3["features"].shape == (B, 12, CHANNELS[-1])
    assert jnp.allclose(out3["features"], ref12["features"], rtol=1e-4, atol=1e-4)

    # 4) bf16 HBM I/O variant (bf16 in/weights/out, f32 in-kernel math) -- numerics
    #    intentionally looser than the f32 reference.
    out_bf16 = jax.jit(functools.partial(encoder_forward, kernel_size=KERNEL_SIZE,
                                         dilations=DILATIONS, tile_l=8,
                                         io_dtype=jnp.bfloat16))(x, params)
    jax.block_until_ready(out_bf16["features"])
    assert jnp.allclose(out_bf16["features"].astype(jnp.float32),
                        ref["features"], rtol=1e-1, atol=1e-1)

    print("KERNEL_OK")
</pallas_src>

<mosaic_0001>
module attributes {stable_mosaic.version = 11 : i64} {
  func.func @_fused_encoder_kernel(%arg0: i32, %arg1: i32, %arg2: memref<1x8x4xf32, #tpu.memory_space<vmem>>, %arg3: memref<3x4x8xf32, #tpu.memory_space<vmem>>, %arg4: memref<1x8xf32, #tpu.memory_space<vmem>>, %arg5: memref<3x8x8xf32, #tpu.memory_space<vmem>>, %arg6: memref<1x8xf32, #tpu.memory_space<vmem>>, %arg7: memref<4x8xf32, #tpu.memory_space<vmem>>, %arg8: memref<1x8xf32, #tpu.memory_space<vmem>>, %arg9: memref<3x8x8xf32, #tpu.memory_space<vmem>>, %arg10: memref<1x8xf32, #tpu.memory_space<vmem>>, %arg11: memref<3x8x8xf32, #tpu.memory_space<vmem>>, %arg12: memref<1x8xf32, #tpu.memory_space<vmem>>, %arg13: memref<1x8x8xf32, #tpu.memory_space<vmem>>, %arg14: memref<1x8x8xf32, #tpu.memory_space<vmem>>, %arg15: memref<16x4xf32, #tpu.memory_space<vmem>>, %arg16: memref<16x8xf32, #tpu.memory_space<vmem>>, %arg17: memref<16x8xf32, #tpu.memory_space<vmem>>, %arg18: memref<16x8xf32, #tpu.memory_space<vmem>>) attributes {dimension_semantics = [#tpu.dimension_semantics<parallel>, #tpu.dimension_semantics<arbitrary>], iteration_bounds = array<i64: 2, 2>, scalar_prefetch = 0 : i64, scratch_operands = 4 : i64, tpu.core_type = #tpu.core_type<tc>, window_params = [{transform_indices = @transform_0, window_bounds = array<i64: 1, 8, 4>}, {pipeline_mode = #tpu.pipeline_mode<synchronous>, transform_indices = @transform_1, window_bounds = array<i64: 3, 4, 8>}, {pipeline_mode = #tpu.pipeline_mode<synchronous>, transform_indices = @transform_2, window_bounds = array<i64: 1, 8>}, {pipeline_mode = #tpu.pipeline_mode<synchronous>, transform_indices = @transform_3, window_bounds = array<i64: 3, 8, 8>}, {pipeline_mode = #tpu.pipeline_mode<synchronous>, transform_indices = @transform_4, window_bounds = array<i64: 1, 8>}, {pipeline_mode = #tpu.pipeline_mode<synchronous>, transform_indices = @transform_5, window_bounds = array<i64: 4, 8>}, {pipeline_mode = #tpu.pipeline_mode<synchronous>, transform_indices = @transform_6, window_bounds = array<i64: 1, 8>}, {pipeline_mode = #tpu.pipeline_mode<synchronous>, transform_indices = @transform_7, window_bounds = array<i64: 3, 8, 8>}, {pipeline_mode = #tpu.pipeline_mode<synchronous>, transform_indices = @transform_8, window_bounds = array<i64: 1, 8>}, {pipeline_mode = #tpu.pipeline_mode<synchronous>, transform_indices = @transform_9, window_bounds = array<i64: 3, 8, 8>}, {pipeline_mode = #tpu.pipeline_mode<synchronous>, transform_indices = @transform_10, window_bounds = array<i64: 1, 8>}, {transform_indices = @transform_11, window_bounds = array<i64: 1, 8, 8>}, {transform_indices = @transform_12, window_bounds = array<i64: 1, 8, 8>}]} {
    %c0 = arith.constant 0 : index
    %c0_0 = arith.constant 0 : index
    %c0_1 = arith.constant 0 : index
    %0 = vector.load %arg2[%c0, %c0_0, %c0_1] : memref<1x8x4xf32, #tpu.memory_space<vmem>>, vector<1x8x4xf32>
    %1 = vector.shape_cast %0 : vector<1x8x4xf32> to vector<8x4xf32>
    %c0_i32 = arith.constant 0 : i32
    %2 = arith.cmpi eq, %arg1, %c0_i32 : i32
    %3 = arith.extui %2 : i1 to i32
    %c0_i32_2 = arith.constant 0 : i32
    %4 = arith.cmpi ne, %3, %c0_i32_2 : i32
    scf.if %4 {
      %cst_115 = arith.constant 0.000000e+00 : f32
      %109 = vector.broadcast %cst_115 : f32 to vector<2x4xf32>
      %c6_116 = arith.constant 6 : index
      %c0_117 = arith.constant 0 : index
      %110 = vector.load %arg15[%c6_116, %c0_117] : memref<16x4xf32, #tpu.memory_space<vmem>>, vector<2x4xf32>
      tpu.vector_store %arg15[%c6_116, %c0_117], %109 {strides = array<i32>} : memref<16x4xf32, #tpu.memory_space<vmem>>, vector<2x4xf32>,
      %cst_118 = arith.constant 0.000000e+00 : f32
      %111 = vector.broadcast %cst_118 : f32 to vector<2x8xf32>
      %c6_119 = arith.constant 6 : index
      %c0_120 = arith.constant 0 : index
      %112 = vector.load %arg16[%c6_119, %c0_120] : memref<16x8xf32, #tpu.memory_space<vmem>>, vector<2x8xf32>
      tpu.vector_store %arg16[%c6_119, %c0_120], %111 {strides = array<i32>} : memref<16x8xf32, #tpu.memory_space<vmem>>, vector<2x8xf32>,
    } else {
    }
    %c8 = arith.constant 8 : index
    %c0_3 = arith.constant 0 : index
    %5 = vector.load %arg15[%c8, %c0_3] : memref<16x4xf32, #tpu.memory_space<vmem>>, vector<8x4xf32>
    tpu.vector_store %arg15[%c8, %c0_3], %1 {strides = array<i32>} : memref<16x4xf32, #tpu.memory_space<vmem>>, vector<8x4xf32>,
    %c0_4 = arith.constant 0 : index
    %c0_5 = arith.constant 0 : index
    %6 = vector.load %arg4[%c0_4, %c0_5] : memref<1x8xf32, #tpu.memory_space<vmem>>, vector<1x8xf32>
    %c6 = arith.constant 6 : index
    %c0_6 = arith.constant 0 : index
    %7 = vector.load %arg15[%c6, %c0_6] : memref<16x4xf32, #tpu.memory_space<vmem>>, vector<8x4xf32>
    %c0_7 = arith.constant 0 : index
    %c0_8 = arith.constant 0 : index
    %c0_9 = arith.constant 0 : index
    %8 = vector.load %arg3[%c0_7, %c0_8, %c0_9] : memref<3x4x8xf32, #tpu.memory_space<vmem>>, vector<1x4x8xf32>
    %9 = vector.shape_cast %8 : vector<1x4x8xf32> to vector<4x8xf32>
    %cst = arith.constant dense<0.000000e+00> : vector<8x8xf32>
    %10 = tpu.matmul %7, %9, %cst {dimension_numbers = #tpu.dot_dimension_numbers<[1], [0], [0], [1], [0, 0, 1, 1], [], []>} : vector<8x4xf32>, vector<4x8xf32>, vector<8x8xf32> -> vector<8x8xf32>
    %11 = vector.broadcast %6 : vector<1x8xf32> to vector<8x8xf32>
    %12 = arith.addf %11, %10 : vector<8x8xf32>
    %c7 = arith.constant 7 : index
    %c0_10 = arith.constant 0 : index
    %13 = vector.load %arg15[%c7, %c0_10] : memref<16x4xf32, #tpu.memory_space<vmem>>, vector<8x4xf32>
    %c1 = arith.constant 1 : index
    %c0_11 = arith.constant 0 : index
    %c0_12 = arith.constant 0 : index
    %14 = vector.load %arg3[%c1, %c0_11, %c0_12] : memref<3x4x8xf32, #tpu.memory_space<vmem>>, vector<1x4x8xf32>
    %15 = vector.shape_cast %14 : vector<1x4x8xf32> to vector<4x8xf32>
    %cst_13 = arith.constant dense<0.000000e+00> : vector<8x8xf32>
    %16 = tpu.matmul %13, %15, %cst_13 {dimension_numbers = #tpu.dot_dimension_numbers<[1], [0], [0], [1], [0, 0, 1, 1], [], []>} : vector<8x4xf32>, vector<4x8xf32>, vector<8x8xf32> -> vector<8x8xf32>
    %17 = arith.addf %12, %16 : vector<8x8xf32>
    %c8_14 = arith.constant 8 : index
    %c0_15 = arith.constant 0 : index
    %18 = vector.load %arg15[%c8_14, %c0_15] : memref<16x4xf32, #tpu.memory_space<vmem>>, vector<8x4xf32>
    %c2 = arith.constant 2 : index
    %c0_16 = arith.constant 0 : index
    %c0_17 = arith.constant 0 : index
    %19 = vector.load %arg3[%c2, %c0_16, %c0_17] : memref<3x4x8xf32, #tpu.memory_space<vmem>>, vector<1x4x8xf32>
    %20 = vector.shape_cast %19 : vector<1x4x8xf32> to vector<4x8xf32>
    %cst_18 = arith.constant dense<0.000000e+00> : vector<8x8xf32>
    %21 = tpu.matmul %18, %20, %cst_18 {dimension_numbers = #tpu.dot_dimension_numbers<[1], [0], [0], [1], [0, 0, 1, 1], [], []>} : vector<8x4xf32>, vector<4x8xf32>, vector<8x8xf32> -> vector<8x8xf32>
    %22 = arith.addf %17, %21 : vector<8x8xf32>
    %cst_19 = arith.constant 0.000000e+00 : f32
    %23 = vector.broadcast %cst_19 : f32 to vector<8x8xf32>
    %24 = arith.maximumf %22, %23 : vector<8x8xf32>
    %c8_20 = arith.constant 8 : index
    %c0_21 = arith.constant 0 : index
    %25 = vector.load %arg16[%c8_20, %c0_21] : memref<16x8xf32, #tpu.memory_space<vmem>>, vector<8x8xf32>
    tpu.vector_store %arg16[%c8_20, %c0_21], %24 {strides = array<i32>} : memref<16x8xf32, #tpu.memory_space<vmem>>, vector<8x8xf32>,
    %c0_22 = arith.constant 0 : index
    %c0_23 = arith.constant 0 : index
    %26 = vector.load %arg6[%c0_22, %c0_23] : memref<1x8xf32, #tpu.memory_space<vmem>>, vector<1x8xf32>
    %c6_24 = arith.constant 6 : index
    %c0_25 = arith.constant 0 : index
    %27 = vector.load %arg16[%c6_24, %c0_25] : memref<16x8xf32, #tpu.memory_space<vmem>>, vector<8x8xf32>
    %c0_26 = arith.constant 0 : index
    %c0_27 = arith.constant 0 : index
    %c0_28 = arith.constant 0 : index
    %28 = vector.load %arg5[%c0_26, %c0_27, %c0_28] : memref<3x8x8xf32, #tpu.memory_space<vmem>>, vector<1x8x8xf32>
    %29 = vector.shape_cast %28 : vector<1x8x8xf32> to vector<8x8xf32>
    %cst_29 = arith.constant dense<0.000000e+00> : vector<8x8xf32>
    %30 = tpu.matmul %27, %29, %cst_29 {dimension_numbers = #tpu.dot_dimension_numbers<[1], [0], [0], [1], [0, 0, 1, 1], [], []>} : vector<8x8xf32>, vector<8x8xf32>, vector<8x8xf32> -> vector<8x8xf32>
    %31 = vector.broadcast %26 : vector<1x8xf32> to vector<8x8xf32>
    %32 = arith.addf %31, %30 : vector<8x8xf32>
    %c7_30 = arith.constant 7 : index
    %c0_31 = arith.constant 0 : index
    %33 = vector.load %arg16[%c7_30, %c0_31] : memref<16x8xf32, #tpu.memory_space<vmem>>, vector<8x8xf32>
    %c1_32 = arith.constant 1 : index
    %c0_33 = arith.constant 0 : index
    %c0_34 = arith.constant 0 : index
    %34 = vector.load %arg5[%c1_32, %c0_33, %c0_34] : memref<3x8x8xf32, #tpu.memory_space<vmem>>, vector<1x8x8xf32>
    %35 = vector.shape_cast %34 : vector<1x8x8xf32> to vector<8x8xf32>
    %cst_35 = arith.constant dense<0.000000e+00> : vector<8x8xf32>
    %36 = tpu.matmul %33, %35, %cst_35 {dimension_numbers = #tpu.dot_dimension_numbers<[1], [0], [0], [1], [0, 0, 1, 1], [], []>} : vector<8x8xf32>, vector<8x8xf32>, vector<8x8xf32> -> vector<8x8xf32>
    %37 = arith.addf %32, %36 : vector<8x8xf32>
    %c8_36 = arith.constant 8 : index
    %c0_37 = arith.constant 0 : index
    %38 = vector.load %arg16[%c8_36, %c0_37] : memref<16x8xf32, #tpu.memory_space<vmem>>, vector<8x8xf32>
    %c2_38 = arith.constant 2 : index
    %c0_39 = arith.constant 0 : index
    %c0_40 = arith.constant 0 : index
    %39 = vector.load %arg5[%c2_38, %c0_39, %c0_40] : memref<3x8x8xf32, #tpu.memory_space<vmem>>, vector<1x8x8xf32>
    %40 = vector.shape_cast %39 : vector<1x8x8xf32> to vector<8x8xf32>
    %cst_41 = arith.constant dense<0.000000e+00> : vector<8x8xf32>
    %41 = tpu.matmul %38, %40, %cst_41 {dimension_numbers = #tpu.dot_dimension_numbers<[1], [0], [0], [1], [0, 0, 1, 1], [], []>} : vector<8x8xf32>, vector<8x8xf32>, vector<8x8xf32> -> vector<8x8xf32>
    %42 = arith.addf %37, %41 : vector<8x8xf32>
    %c0_42 = arith.constant 0 : index
    %c0_43 = arith.constant 0 : index
    %43 = vector.load %arg7[%c0_42, %c0_43] : memref<4x8xf32, #tpu.memory_space<vmem>>, vector<4x8xf32>
    %cst_44 = arith.constant dense<0.000000e+00> : vector<8x8xf32>
    %44 = tpu.matmul %1, %43, %cst_44 {dimension_numbers = #tpu.dot_dimension_numbers<[1], [0], [0], [1], [0, 0, 1, 1], [], []>} : vector<8x4xf32>, vector<4x8xf32>, vector<8x8xf32> -> vector<8x8xf32>
    %c0_45 = arith.constant 0 : index
    %c0_46 = arith.constant 0 : index
    %45 = vector.load %arg8[%c0_45, %c0_46] : memref<1x8xf32, #tpu.memory_space<vmem>>, vector<1x8xf32>
    %46 = vector.broadcast %45 : vector<1x8xf32> to vector<8x8xf32>
    %47 = arith.addf %44, %46 : vector<8x8xf32>
    %48 = arith.addf %42, %47 : vector<8x8xf32>
    %cst_47 = arith.constant 0.000000e+00 : f32
    %49 = vector.broadcast %cst_47 : f32 to vector<8x8xf32>
    %50 = arith.maximumf %48, %49 : vector<8x8xf32>
    %c14 = arith.constant 14 : index
    %c0_48 = arith.constant 0 : index
    %51 = vector.load %arg15[%c14, %c0_48] : memref<16x4xf32, #tpu.memory_space<vmem>>, vector<2x4xf32>
    %c14_49 = arith.constant 14 : index
    %c0_50 = arith.constant 0 : index
    %52 = vector.load %arg16[%c14_49, %c0_50] : memref<16x8xf32, #tpu.memory_space<vmem>>, vector<2x8xf32>
    %c6_51 = arith.constant 6 : index
    %c0_52 = arith.constant 0 : index
    %53 = vector.load %arg15[%c6_51, %c0_52] : memref<16x4xf32, #tpu.memory_space<vmem>>, vector<2x4xf32>
    tpu.vector_store %arg15[%c6_51, %c0_52], %51 {strides = array<i32>} : memref<16x4xf32, #tpu.memory_space<vmem>>, vector<2x4xf32>,
    %c6_53 = arith.constant 6 : index
    %c0_54 = arith.constant 0 : index
    %54 = vector.load %arg16[%c6_53, %c0_54] : memref<16x8xf32, #tpu.memory_space<vmem>>, vector<2x8xf32>
    tpu.vector_store %arg16[%c6_53, %c0_54], %52 {strides = array<i32>} : memref<16x8xf32, #tpu.memory_space<vmem>>, vector<2x8xf32>,
    %c0_55 = arith.constant 0 : index
    %c0_56 = arith.constant 0 : index
    %c0_57 = arith.constant 0 : index
    %55 = vector.load %arg13[%c0_55, %c0_56, %c0_57] : memref<1x8x8xf32, #tpu.memory_space<vmem>>, vector<1x8x8xf32>
    %56 = vector.shape_cast %55 : vector<1x8x8xf32> to vector<8x8xf32>
    %57 = vector.shape_cast %50 : vector<8x8xf32> to vector<1x8x8xf32>
    tpu.vector_store %arg13[%c0_55, %c0_56, %c0_57], %57 {strides = array<i32>} : memref<1x8x8xf32, #tpu.memory_space<vmem>>, vector<1x8x8xf32>,
    %c0_i32_58 = arith.constant 0 : i32
    %58 = arith.cmpi eq, %arg1, %c0_i32_58 : i32
    %59 = arith.extui %58 : i1 to i32
    %c0_i32_59 = arith.constant 0 : i32
    %60 = arith.cmpi ne, %59, %c0_i32_59 : i32
    scf.if %60 {
      %cst_115 = arith.constant 0.000000e+00 : f32
      %109 = vector.broadcast %cst_115 : f32 to vector<4x8xf32>
      %c4_116 = arith.constant 4 : index
      %c0_117 = arith.constant 0 : index
      %110 = vector.load %arg17[%c4_116, %c0_117] : memref<16x8xf32, #tpu.memory_space<vmem>>, vector<4x8xf32>
      tpu.vector_store %arg17[%c4_116, %c0_117], %109 {strides = array<i32>} : memref<16x8xf32, #tpu.memory_space<vmem>>, vector<4x8xf32>,
      %cst_118 = arith.constant 0.000000e+00 : f32
      %111 = vector.broadcast %cst_118 : f32 to vector<4x8xf32>
      %c4_119 = arith.constant 4 : index
      %c0_120 = arith.constant 0 : index
      %112 = vector.load %arg18[%c4_119, %c0_120] : memref<16x8xf32, #tpu.memory_space<vmem>>, vector<4x8xf32>
      tpu.vector_store %arg18[%c4_119, %c0_120], %111 {strides = array<i32>} : memref<16x8xf32, #tpu.memory_space<vmem>>, vector<4x8xf32>,
    } else {
    }
    %c8_60 = arith.constant 8 : index
    %c0_61 = arith.constant 0 : index
    %61 = vector.load %arg17[%c8_60, %c0_61] : memref<16x8xf32, #tpu.memory_space<vmem>>, vector<8x8xf32>
    tpu.vector_store %arg17[%c8_60, %c0_61], %50 {strides = array<i32>} : memref<16x8xf32, #tpu.memory_space<vmem>>, vector<8x8xf32>,
    %c0_62 = arith.constant 0 : index
    %c0_63 = arith.constant 0 : index
    %62 = vector.load %arg10[%c0_62, %c0_63] : memref<1x8xf32, #tpu.memory_space<vmem>>, vector<1x8xf32>
    %c4 = arith.constant 4 : index
    %c0_64 = arith.constant 0 : index
    %63 = vector.load %arg17[%c4, %c0_64] : memref<16x8xf32, #tpu.memory_space<vmem>>, vector<8x8xf32>
    %c0_65 = arith.constant 0 : index
    %c0_66 = arith.constant 0 : index
    %c0_67 = arith.constant 0 : index
    %64 = vector.load %arg9[%c0_65, %c0_66, %c0_67] : memref<3x8x8xf32, #tpu.memory_space<vmem>>, vector<1x8x8xf32>
    %65 = vector.shape_cast %64 : vector<1x8x8xf32> to vector<8x8xf32>
    %cst_68 = arith.constant dense<0.000000e+00> : vector<8x8xf32>
    %66 = tpu.matmul %63, %65, %cst_68 {dimension_numbers = #tpu.dot_dimension_numbers<[1], [0], [0], [1], [0, 0, 1, 1], [], []>} : vector<8x8xf32>, vector<8x8xf32>, vector<8x8xf32> -> vector<8x8xf32>
    %67 = vector.broadcast %62 : vector<1x8xf32> to vector<8x8xf32>
    %68 = arith.addf %67, %66 : vector<8x8xf32>
    %c6_69 = arith.constant 6 : index
    %c0_70 = arith.constant 0 : index
    %69 = vector.load %arg17[%c6_69, %c0_70] : memref<16x8xf32, #tpu.memory_space<vmem>>, vector<8x8xf32>
    %c1_71 = arith.constant 1 : index
    %c0_72 = arith.constant 0 : index
    %c0_73 = arith.constant 0 : index
    %70 = vector.load %arg9[%c1_71, %c0_72, %c0_73] : memref<3x8x8xf32, #tpu.memory_space<vmem>>, vector<1x8x8xf32>
    %71 = vector.shape_cast %70 : vector<1x8x8xf32> to vector<8x8xf32>
    %cst_74 = arith.constant dense<0.000000e+00> : vector<8x8xf32>
    %72 = tpu.matmul %69, %71, %cst_74 {dimension_numbers = #tpu.dot_dimension_numbers<[1], [0], [0], [1], [0, 0, 1, 1], [], []>} : vector<8x8xf32>, vector<8x8xf32>, vector<8x8xf32> -> vector<8x8xf32>
    %73 = arith.addf %68, %72 : vector<8x8xf32>
    %c8_75 = arith.constant 8 : index
    %c0_76 = arith.constant 0 : index
    %74 = vector.load %arg17[%c8_75, %c0_76] : memref<16x8xf32, #tpu.memory_space<vmem>>, vector<8x8xf32>
    %c2_77 = arith.constant 2 : index
    %c0_78 = arith.constant 0 : index
    %c0_79 = arith.constant 0 : index
    %75 = vector.load %arg9[%c2_77, %c0_78, %c0_79] : memref<3x8x8xf32, #tpu.memory_space<vmem>>, vector<1x8x8xf32>
    %76 = vector.shape_cast %75 : vector<1x8x8xf32> to vector<8x8xf32>
    %cst_80 = arith.constant dense<0.000000e+00> : vector<8x8xf32>
    %77 = tpu.matmul %74, %76, %cst_80 {dimension_numbers = #tpu.dot_dimension_numbers<[1], [0], [0], [1], [0, 0, 1, 1], [], []>} : vector<8x8xf32>, vector<8x8xf32>, vector<8x8xf32> -> vector<8x8xf32>
    %78 = arith.addf %73, %77 : vector<8x8xf32>
    %cst_81 = arith.constant 0.000000e+00 : f32
    %79 = vector.broadcast %cst_81 : f32 to vector<8x8xf32>
    %80 = arith.maximumf %78, %79 : vector<8x8xf32>
    %c8_82 = arith.constant 8 : index
    %c0_83 = arith.constant 0 : index
    %81 = vector.load %arg18[%c8_82, %c0_83] : memref<16x8xf32, #tpu.memory_space<vmem>>, vector<8x8xf32>
    tpu.vector_store %arg18[%c8_82, %c0_83], %80 {strides = array<i32>} : memref<16x8xf32, #tpu.memory_space<vmem>>, vector<8x8xf32>,
    %c0_84 = arith.constant 0 : index
    %c0_85 = arith.constant 0 : index
    %82 = vector.load %arg12[%c0_84, %c0_85] : memref<1x8xf32, #tpu.memory_space<vmem>>, vector<1x8xf32>
    %c4_86 = arith.constant 4 : index
    %c0_87 = arith.constant 0 : index
    %83 = vector.load %arg18[%c4_86, %c0_87] : memref<16x8xf32, #tpu.memory_space<vmem>>, vector<8x8xf32>
    %c0_88 = arith.constant 0 : index
    %c0_89 = arith.constant 0 : index
    %c0_90 = arith.constant 0 : index
    %84 = vector.load %arg11[%c0_88, %c0_89, %c0_90] : memref<3x8x8xf32, #tpu.memory_space<vmem>>, vector<1x8x8xf32>
    %85 = vector.shape_cast %84 : vector<1x8x8xf32> to vector<8x8xf32>
    %cst_91 = arith.constant dense<0.000000e+00> : vector<8x8xf32>
    %86 = tpu.matmul %83, %85, %cst_91 {dimension_numbers = #tpu.dot_dimension_numbers<[1], [0], [0], [1], [0, 0, 1, 1], [], []>} : vector<8x8xf32>, vector<8x8xf32>, vector<8x8xf32> -> vector<8x8xf32>
    %87 = vector.broadcast %82 : vector<1x8xf32> to vector<8x8xf32>
    %88 = arith.addf %87, %86 : vector<8x8xf32>
    %c6_92 = arith.constant 6 : index
    %c0_93 = arith.constant 0 : index
    %89 = vector.load %arg18[%c6_92, %c0_93] : memref<16x8xf32, #tpu.memory_space<vmem>>, vector<8x8xf32>
    %c1_94 = arith.constant 1 : index
    %c0_95 = arith.constant 0 : index
    %c0_96 = arith.constant 0 : index
    %90 = vector.load %arg11[%c1_94, %c0_95, %c0_96] : memref<3x8x8xf32, #tpu.memory_space<vmem>>, vector<1x8x8xf32>
    %91 = vector.shape_cast %90 : vector<1x8x8xf32> to vector<8x8xf32>
    %cst_97 = arith.constant dense<0.000000e+00> : vector<8x8xf32>
    %92 = tpu.matmul %89, %91, %cst_97 {dimension_numbers = #tpu.dot_dimension_numbers<[1], [0], [0], [1], [0, 0, 1, 1], [], []>} : vector<8x8xf32>, vector<8x8xf32>, vector<8x8xf32> -> vector<8x8xf32>
    %93 = arith.addf %88, %92 : vector<8x8xf32>
    %c8_98 = arith.constant 8 : index
    %c0_99 = arith.constant 0 : index
    %94 = vector.load %arg18[%c8_98, %c0_99] : memref<16x8xf32, #tpu.memory_space<vmem>>, vector<8x8xf32>
    %c2_100 = arith.constant 2 : index
    %c0_101 = arith.constant 0 : index
    %c0_102 = arith.constant 0 : index
    %95 = vector.load %arg11[%c2_100, %c0_101, %c0_102] : memref<3x8x8xf32, #tpu.memory_space<vmem>>, vector<1x8x8xf32>
    %96 = vector.shape_cast %95 : vector<1x8x8xf32> to vector<8x8xf32>
    %cst_103 = arith.constant dense<0.000000e+00> : vector<8x8xf32>
    %97 = tpu.matmul %94, %96, %cst_103 {dimension_numbers = #tpu.dot_dimension_numbers<[1], [0], [0], [1], [0, 0, 1, 1], [], []>} : vector<8x8xf32>, vector<8x8xf32>, vector<8x8xf32> -> vector<8x8xf32>
    %98 = arith.addf %93, %97 : vector<8x8xf32>
    %99 = arith.addf %98, %50 : vector<8x8xf32>
    %cst_104 = arith.constant 0.000000e+00 : f32
    %100 = vector.broadcast %cst_104 : f32 to vector<8x8xf32>
    %101 = arith.maximumf %99, %100 : vector<8x8xf32>
    %c12 = arith.constant 12 : index
    %c0_105 = arith.constant 0 : index
    %102 = vector.load %arg17[%c12, %c0_105] : memref<16x8xf32, #tpu.memory_space<vmem>>, vector<4x8xf32>
    %c12_106 = arith.constant 12 : index
    %c0_107 = arith.constant 0 : index
    %103 = vector.load %arg18[%c12_106, %c0_107] : memref<16x8xf32, #tpu.memory_space<vmem>>, vector<4x8xf32>
    %c4_108 = arith.constant 4 : index
    %c0_109 = arith.constant 0 : index
    %104 = vector.load %arg17[%c4_108, %c0_109] : memref<16x8xf32, #tpu.memory_space<vmem>>, vector<4x8xf32>
    tpu.vector_store %arg17[%c4_108, %c0_109], %102 {strides = array<i32>} : memref<16x8xf32, #tpu.memory_space<vmem>>, vector<4x8xf32>,
    %c4_110 = arith.constant 4 : index
    %c0_111 = arith.constant 0 : index
    %105 = vector.load %arg18[%c4_110, %c0_111] : memref<16x8xf32, #tpu.memory_space<vmem>>, vector<4x8xf32>
    tpu.vector_store %arg18[%c4_110, %c0_111], %103 {strides = array<i32>} : memref<16x8xf32, #tpu.memory_space<vmem>>, vector<4x8xf32>,
    %c0_112 = arith.constant 0 : index
    %c0_113 = arith.constant 0 : index
    %c0_114 = arith.constant 0 : index
    %106 = vector.load %arg14[%c0_112, %c0_113, %c0_114] : memref<1x8x8xf32, #tpu.memory_space<vmem>>, vector<1x8x8xf32>
    %107 = vector.shape_cast %106 : vector<1x8x8xf32> to vector<8x8xf32>
    %108 = vector.shape_cast %101 : vector<8x8xf32> to vector<1x8x8xf32>
    tpu.vector_store %arg14[%c0_112, %c0_113, %c0_114], %108 {strides = array<i32>} : memref<1x8x8xf32, #tpu.memory_space<vmem>>, vector<1x8x8xf32>,
    return
  }
  func.func @transform_0(%arg0: i32, %arg1: i32) -> (i32, i32, i32) {
    %c0_i32 = arith.constant 0 : i32
    %c0_i32_0 = arith.constant 0 : i32
    return %arg0, %arg1, %c0_i32 : i32, i32, i32
  }
  func.func @transform_1(%arg0: i32, %arg1: i32) -> (i32, i32, i32) {
    %c0_i32 = arith.constant 0 : i32
    %c0_i32_0 = arith.constant 0 : i32
    %c0_i32_1 = arith.constant 0 : i32
    %c0_i32_2 = arith.constant 0 : i32
    return %c0_i32, %c0_i32_0, %c0_i32_1 : i32, i32, i32
  }
  func.func @transform_2(%arg0: i32, %arg1: i32) -> (i32, i32) {
    %c0_i32 = arith.constant 0 : i32
    %c0_i32_0 = arith.constant 0 : i32
    %c0_i32_1 = arith.constant 0 : i32
    return %c0_i32, %c0_i32_0 : i32, i32
  }
  func.func @transform_3(%arg0: i32, %arg1: i32) -> (i32, i32, i32) {
    %c0_i32 = arith.constant 0 : i32
    %c0_i32_0 = arith.constant 0 : i32
    %c0_i32_1 = arith.constant 0 : i32
    %c0_i32_2 = arith.constant 0 : i32
    return %c0_i32, %c0_i32_0, %c0_i32_1 : i32, i32, i32
  }
  func.func @transform_4(%arg0: i32, %arg1: i32) -> (i32, i32) {
    %c0_i32 = arith.constant 0 : i32
    %c0_i32_0 = arith.constant 0 : i32
    %c0_i32_1 = arith.constant 0 : i32
    return %c0_i32, %c0_i32_0 : i32, i32
  }
  func.func @transform_5(%arg0: i32, %arg1: i32) -> (i32, i32) {
    %c0_i32 = arith.constant 0 : i32
    %c0_i32_0 = arith.constant 0 : i32
    %c0_i32_1 = arith.constant 0 : i32
    return %c0_i32, %c0_i32_0 : i32, i32
  }
  func.func @transform_6(%arg0: i32, %arg1: i32) -> (i32, i32) {
    %c0_i32 = arith.constant 0 : i32
    %c0_i32_0 = arith.constant 0 : i32
    %c0_i32_1 = arith.constant 0 : i32
    return %c0_i32, %c0_i32_0 : i32, i32
  }
  func.func @transform_7(%arg0: i32, %arg1: i32) -> (i32, i32, i32) {
    %c0_i32 = arith.constant 0 : i32
    %c0_i32_0 = arith.constant 0 : i32
    %c0_i32_1 = arith.constant 0 : i32
    %c0_i32_2 = arith.constant 0 : i32
    return %c0_i32, %c0_i32_0, %c0_i32_1 : i32, i32, i32
  }
  func.func @transform_8(%arg0: i32, %arg1: i32) -> (i32, i32) {
    %c0_i32 = arith.constant 0 : i32
    %c0_i32_0 = arith.constant 0 : i32
    %c0_i32_1 = arith.constant 0 : i32
    return %c0_i32, %c0_i32_0 : i32, i32
  }
  func.func @transform_9(%arg0: i32, %arg1: i32) -> (i32, i32, i32) {
    %c0_i32 = arith.constant 0 : i32
    %c0_i32_0 = arith.constant 0 : i32
    %c0_i32_1 = arith.constant 0 : i32
    %c0_i32_2 = arith.constant 0 : i32
    return %c0_i32, %c0_i32_0, %c0_i32_1 : i32, i32, i32
  }
  func.func @transform_10(%arg0: i32, %arg1: i32) -> (i32, i32) {
    %c0_i32 = arith.constant 0 : i32
    %c0_i32_0 = arith.constant 0 : i32
    %c0_i32_1 = arith.constant 0 : i32
    return %c0_i32, %c0_i32_0 : i32, i32
  }
  func.func @transform_11(%arg0: i32, %arg1: i32) -> (i32, i32, i32) {
    %c0_i32 = arith.constant 0 : i32
    %c0_i32_0 = arith.constant 0 : i32
    return %arg0, %arg1, %c0_i32 : i32, i32, i32
  }
  func.func @transform_12(%arg0: i32, %arg1: i32) -> (i32, i32, i32) {
    %c0_i32 = arith.constant 0 : i32
    %c0_i32_0 = arith.constant 0 : i32
    return %arg0, %arg1, %c0_i32 : i32, i32, i32
  }
}

</mosaic_0001>

<llo_original>
// kernel: encoder_forward.1
$region0: #{encoder_forward.1}
  #allocation0 [shape = 'u32[]', space=smem, size = 0x4, offset = 0x4, fixed_abs, tag = 'smem constant byte address 0x4 - core index']
  #allocation1 [shape = 'u32[144,128]{1,0:T(1,128)}', space=vmem, size = 0x12000, scoped, tag = 'internal scratch']
  #allocation2 [shape = 'f32[16,4]{1,0:T(8,128)}', space=vmem, size = 0x2000, scoped, tag = 'scratch operand']
  #allocation3 [shape = 'f32[16,8]{1,0:T(8,128)}', space=vmem, size = 0x2000, scoped, tag = 'scratch operand']
  #allocation4 [shape = 'f32[16,8]{1,0:T(8,128)}', space=vmem, size = 0x2000, scoped, tag = 'scratch operand']
  #allocation5 [shape = 'f32[16,8]{1,0:T(8,128)}', space=vmem, size = 0x2000, scoped, tag = 'scratch operand']
  %s0 = inlined_call_operand.vmem [shape: f32[2,16,4], index: 0, kind: input, shape index: {}]
  %s1 = inlined_call_operand.vmem [shape: f32[3,4,8], index: 1, kind: input, shape index: {}]
  %s2 = inlined_call_operand.hbm [shape: f32[1,8], index: 2, kind: input, shape index: {}]
  %s3 = inlined_call_operand.vmem [shape: f32[3,8,8], index: 3, kind: input, shape index: {}]
  %s4 = inlined_call_operand.hbm [shape: f32[1,8], index: 4, kind: input, shape index: {}]
  %s5 = inlined_call_operand.hbm [shape: f32[4,8], index: 5, kind: input, shape index: {}]
  %s6 = inlined_call_operand.hbm [shape: f32[1,8], index: 6, kind: input, shape index: {}]
  %s7 = inlined_call_operand.vmem [shape: f32[3,8,8], index: 7, kind: input, shape index: {}]
  %s8 = inlined_call_operand.vmem [shape: f32[1,8], index: 8, kind: input, shape index: {}]
  %s9 = inlined_call_operand.hbm [shape: f32[3,8,8], index: 9, kind: input, shape index: {}]
  %s10 = inlined_call_operand.vmem [shape: f32[1,8], index: 10, kind: input, shape index: {}]
  %s11 = inlined_call_operand.vmem [shape: f32[2,16,8], index: 11, kind: output, shape index: {0}]
  %s12 = inlined_call_operand.vmem [shape: f32[2,16,8], index: 12, kind: output, shape index: {1}]
  %13 = xla_tuple %s11, %s12
  %s14 = sld [smem:[#allocation0]]
  $region113: #{encoder_forward.1} parent=0
    _
  %s16 = ssub.s32 1, %s14
  %s17 = scalar_select 0, %s16, %s14
  $region1: #{encoder_forward.1} parent=0
    #allocation6 [shape = 'u8[512]{0}', space=vmem, size = 0x400, scoped, tag = 'input window, operand 2, single buffered']
    #allocation7 [shape = 's32[2]{0}', space=sflag, size = 0x8, scoped, tag = 'scoped memory for encoder_forward.1']
    #allocation8 [shape = 'u8[512]{0}', space=vmem, size = 0x400, scoped, tag = 'input window, operand 4, single buffered']
    #allocation9 [shape = 's32[1]{0}', space=sflag, size = 0x4, scoped, tag = 'scoped memory for encoder_forward.1']
    #allocation10 [shape = 'u8[2048]{0}', space=vmem, size = 0x800, scoped, tag = 'input window, operand 5, single buffered']
    #allocation11 [shape = 'u8[512]{0}', space=vmem, size = 0x400, scoped, tag = 'input window, operand 6, single buffered']
    #allocation12 [shape = 's32[1]{0}', space=sflag, size = 0x4, scoped, tag = 'scoped memory for encoder_forward.1']
    #allocation13 [shape = 'u8[12288]{0}', space=vmem, size = 0x3000, scoped, tag = 'input window, operand 9, single buffered']
    %18 = vsyncpa [#allocation7], 0
    %19 = vsyncpa [#allocation9], 0
    %20 = vsyncpa [#allocation12], 0
    loop: start=0, step=1, limit=6
    $region2: #{encoder_forward.1} parent=1 // loop_pre_header
      _
    $region3: #{encoder_forward.1} parent=1 // loop_header
      %s22 = sphi 0, %s26
      %p23 = scmp.ge.s32.totalorder %s22, 6
      %s29 = sphi 0, %s41
      %s30 = sphi 0, %s37
      %s31 = sphi 0, %s29
      %s32 = sphi 0, %s30
      %s33 = sphi 0, %s31
      %s34 = sphi 0, %s32
      %s46 = sphi 0, %s48
      %s49 = sphi 0, %s46
      %s50 = sphi 0, %s49
      %s66 = sphi 0, %s50
      %s70 = sphi 0, %s70
      %s72 = sphi 0, %s70
      %s73 = sphi 0, %s72
      %s87 = sphi 0, %s73
      %s91 = sphi 0, %s91
      %s93 = sphi 0, %s91
      %s94 = sphi 0, %s93
      %s108 = sphi 0, %s94
      %s112 = sphi 0, %s112
      %s114 = sphi 0, %s112
      %s115 = sphi 0, %s114
      %s129 = sphi 0, %s115
      %s133 = sphi 0, %s133
      %s135 = sphi 0, %s133
      %s136 = sphi 0, %s135
      %s150 = sphi 0, %s136
      %s154 = sphi 0, %s154
      %s156 = sphi 0, %s154
      %s157 = sphi 0, %s156
      %s171 = sphi 0, %s157
      %s175 = sphi 0, %s175
      %s177 = sphi 0, %s175
      %s178 = sphi 0, %s177
      %s192 = sphi 0, %s178
      %s196 = sphi 0, %s196
      %s198 = sphi 0, %s196
      %s199 = sphi 0, %s198
      %s213 = sphi 0, %s199
      %s217 = sphi 0, %s217
      %s219 = sphi 0, %s217
      %s220 = sphi 0, %s219
      %s234 = sphi 0, %s220
      %s238 = sphi 0, %s238
      %s240 = sphi 0, %s238
      %s241 = sphi 0, %s240
      %s255 = sphi 0, %s241
      %s259 = sphi 0, %s259
      %s261 = sphi 0, %s259
      %s262 = sphi 0, %s261
      %s276 = sphi 0, %s262
      %s284 = sphi 0, %s286
      %s287 = sphi 0, %s284
      %s288 = sphi 0, %s287
      %s304 = sphi 0, %s288
      %s312 = sphi 0, %s314
      %s315 = sphi 0, %s312
      %s316 = sphi 0, %s315
      %s332 = sphi 0, %s316
    $region4: #{encoder_forward.1} parent=1 // loop_header_branch
      %25 = sbr.rel (%p23) target = $region8
    $region5: #{encoder_forward.1} parent=1 // loop_body
      %s27 = ssub.s32 %s22, 1
      %s28 = ssub.s32 %s22, 2
      %s35 = sadd.s32 1, %s30
      %p36 = scmp.ge.s32.totalorder %s35, 2
      %s37 = scalar_select %p36, 0, %s35
      %s38 = sadd.s32 1, %s29
      %s39 = scalar_select %p36, %s38, %s29
      %p40 = scmp.ge.s32.totalorder %s39, 2
      %s41 = scalar_select %p40, 0, %s39
      %s42 = ssub.s32 %s29, %s41
      %s43 = ssub.s32 %s30, %s37
      %s44 = sor.u32 %s42, %s43
      %p45 = scmp.eq.s32.totalorder %s44, 0
      %s47 = sadd.s32 %s46, 1
      %s48 = scalar_select %p45, %s46, %s47
      %p51 = pneg %p45
      %p52 = scmp.eq.s32.totalorder %s22, 3
      %p53 = por %p51, %p52
      %p54 = scmp.ne.s32.totalorder %s46, %s49
      %p55 = scmp.eq.s32.totalorder %s22, 0
      %p56 = por %p54, %p55
      %p57 = scmp.ne.s32.totalorder %s46, %s49
      %p58 = scmp.eq.s32.totalorder %s27, 3
      %p59 = por %p57, %p58
      %p60 = scmp.ne.s32.totalorder %s49, %s50
      %p61 = scmp.eq.s32.totalorder %s27, 0
      %p62 = por %p60, %p61
      %p63 = scmp.ne.s32.totalorder %s49, %s50
      %p64 = scmp.eq.s32.totalorder %s28, 3
      %p65 = por %p63, %p64
      %p67 = scmp.ne.s32.totalorder %s50, %s66
      %p68 = scmp.eq.s32.totalorder %s28, 0
      %p69 = por %p67, %p68
      %s71 = sadd.s32 %s70, 1
      %p74 = scmp.eq.s32.totalorder %s22, 3
      %p75 = scmp.ne.s32.totalorder %s70, %s72
      %p76 = scmp.eq.s32.totalorder %s22, 0
      %p77 = por %p75, %p76
      %p78 = scmp.ne.s32.totalorder %s70, %s72
      %p79 = scmp.eq.s32.totalorder %s27, 3
      %p80 = por %p78, %p79
      %p81 = scmp.ne.s32.totalorder %s72, %s73
      %p82 = scmp.eq.s32.totalorder %s27, 0
      %p83 = por %p81, %p82
      %p84 = scmp.ne.s32.totalorder %s72, %s73
      %p85 = scmp.eq.s32.totalorder %s28, 3
      %p86 = por %p84, %p85
      %p88 = scmp.ne.s32.totalorder %s73, %s87
      %p89 = scmp.eq.s32.totalorder %s28, 0
      %p90 = por %p88, %p89
      %s92 = sadd.s32 %s91, 1
      %p95 = scmp.eq.s32.totalorder %s22, 3
      %p96 = scmp.ne.s32.totalorder %s91, %s93
      %p97 = scmp.eq.s32.totalorder %s22, 0
      %p98 = por %p96, %p97
      %p99 = scmp.ne.s32.totalorder %s91, %s93
      %p100 = scmp.eq.s32.totalorder %s27, 3
      %p101 = por %p99, %p100
      %p102 = scmp.ne.s32.totalorder %s93, %s94
      %p103 = scmp.eq.s32.totalorder %s27, 0
      %p104 = por %p102, %p103
      %p105 = scmp.ne.s32.totalorder %s93, %s94
      %p106 = scmp.eq.s32.totalorder %s28, 3
      %p107 = por %p105, %p106
      %p109 = scmp.ne.s32.totalorder %s94, %s108
      %p110 = scmp.eq.s32.totalorder %s28, 0
      %p111 = por %p109, %p110
      %s113 = sadd.s32 %s112, 1
      %p116 = scmp.eq.s32.totalorder %s22, 3
      %p117 = scmp.ne.s32.totalorder %s112, %s114
      %p118 = scmp.eq.s32.totalorder %s22, 0
      %p119 = por %p117, %p118
      %p120 = scmp.ne.s32.totalorder %s112, %s114
      %p121 = scmp.eq.s32.totalorder %s27, 3
      %p122 = por %p120, %p121
      %p123 = scmp.ne.s32.totalorder %s114, %s115
      %p124 = scmp.eq.s32.totalorder %s27, 0
      %p125 = por %p123, %p124
      %p126 = scmp.ne.s32.totalorder %s114, %s115
      %p127 = scmp.eq.s32.totalorder %s28, 3
      %p128 = por %p126, %p127
      %p130 = scmp.ne.s32.totalorder %s115, %s129
      %p131 = scmp.eq.s32.totalorder %s28, 0
      %p132 = por %p130, %p131
      %s134 = sadd.s32 %s133, 1
      %p137 = scmp.eq.s32.totalorder %s22, 3
      %p138 = scmp.ne.s32.totalorder %s133, %s135
      %p139 = scmp.eq.s32.totalorder %s22, 0
      %p140 = por %p138, %p139
      %p141 = scmp.ne.s32.totalorder %s133, %s135
      %p142 = scmp.eq.s32.totalorder %s27, 3
      %p143 = por %p141, %p142
      %p144 = scmp.ne.s32.totalorder %s135, %s136
      %p145 = scmp.eq.s32.totalorder %s27, 0
      %p146 = por %p144, %p145
      %p147 = scmp.ne.s32.totalorder %s135, %s136
      %p148 = scmp.eq.s32.totalorder %s28, 3
      %p149 = por %p147, %p148
      %p151 = scmp.ne.s32.totalorder %s136, %s150
      %p152 = scmp.eq.s32.totalorder %s28, 0
      %p153 = por %p151, %p152
      %s155 = sadd.s32 %s154, 1
      %p158 = scmp.eq.s32.totalorder %s22, 3
      %p159 = scmp.ne.s32.totalorder %s154, %s156
      %p160 = scmp.eq.s32.totalorder %s22, 0
      %p161 = por %p159, %p160
      %p162 = scmp.ne.s32.totalorder %s154, %s156
      %p163 = scmp.eq.s32.totalorder %s27, 3
      %p164 = por %p162, %p163
      %p165 = scmp.ne.s32.totalorder %s156, %s157
      %p166 = scmp.eq.s32.totalorder %s27, 0
      %p167 = por %p165, %p166
      %p168 = scmp.ne.s32.totalorder %s156, %s157
      %p169 = scmp.eq.s32.totalorder %s28, 3
      %p170 = por %p168, %p169
      %p172 = scmp.ne.s32.totalorder %s157, %s171
      %p173 = scmp.eq.s32.totalorder %s28, 0
      %p174 = por %p172, %p173
      %s176 = sadd.s32 %s175, 1
      %p179 = scmp.eq.s32.totalorder %s22, 3
      %p180 = scmp.ne.s32.totalorder %s175, %s177
      %p181 = scmp.eq.s32.totalorder %s22, 0
      %p182 = por %p180, %p181
      %p183 = scmp.ne.s32.totalorder %s175, %s177
      %p184 = scmp.eq.s32.totalorder %s27, 3
      %p185 = por %p183, %p184
      %p186 = scmp.ne.s32.totalorder %s177, %s178
      %p187 = scmp.eq.s32.totalorder %s27, 0
      %p188 = por %p186, %p187
      %p189 = scmp.ne.s32.totalorder %s177, %s178
      %p190 = scmp.eq.s32.totalorder %s28, 3
      %p191 = por %p189, %p190
      %p193 = scmp.ne.s32.totalorder %s178, %s192
      %p194 = scmp.eq.s32.totalorder %s28, 0
      %p195 = por %p193, %p194
      %s197 = sadd.s32 %s196, 1
      %p200 = scmp.eq.s32.totalorder %s22, 3
      %p201 = scmp.ne.s32.totalorder %s196, %s198
      %p202 = scmp.eq.s32.totalorder %s22, 0
      %p203 = por %p201, %p202
      %p204 = scmp.ne.s32.totalorder %s196, %s198
      %p205 = scmp.eq.s32.totalorder %s27, 3
      %p206 = por %p204, %p205
      %p207 = scmp.ne.s32.totalorder %s198, %s199
      %p208 = scmp.eq.s32.totalorder %s27, 0
      %p209 = por %p207, %p208
      %p210 = scmp.ne.s32.totalorder %s198, %s199
      %p211 = scmp.eq.s32.totalorder %s28, 3
      %p212 = por %p210, %p211
      %p214 = scmp.ne.s32.totalorder %s199, %s213
      %p215 = scmp.eq.s32.totalorder %s28, 0
      %p216 = por %p214, %p215
      %s218 = sadd.s32 %s217, 1
      %p221 = scmp.eq.s32.totalorder %s22, 3
      %p222 = scmp.ne.s32.totalorder %s217, %s219
      %p223 = scmp.eq.s32.totalorder %s22, 0
      %p224 = por %p222, %p223
      %p225 = scmp.ne.s32.totalorder %s217, %s219
      %p226 = scmp.eq.s32.totalorder %s27, 3
      %p227 = por %p225, %p226
      %p228 = scmp.ne.s32.totalorder %s219, %s220
      %p229 = scmp.eq.s32.totalorder %s27, 0
      %p230 = por %p228, %p229
      %p231 = scmp.ne.s32.totalorder %s219, %s220
      %p232 = scmp.eq.s32.totalorder %s28, 3
      %p233 = por %p231, %p232
      %p235 = scmp.ne.s32.totalorder %s220, %s234
      %p236 = scmp.eq.s32.totalorder %s28, 0
      %p237 = por %p235, %p236
      %s239 = sadd.s32 %s238, 1
      %p242 = scmp.eq.s32.totalorder %s22, 3
      %p243 = scmp.ne.s32.totalorder %s238, %s240
      %p244 = scmp.eq.s32.totalorder %s22, 0
      %p245 = por %p243, %p244
      %p246 = scmp.ne.s32.totalorder %s238, %s240
      %p247 = scmp.eq.s32.totalorder %s27, 3
      %p248 = por %p246, %p247
      %p249 = scmp.ne.s32.totalorder %s240, %s241
      %p250 = scmp.eq.s32.totalorder %s27, 0
      %p251 = por %p249, %p250
      %p252 = scmp.ne.s32.totalorder %s240, %s241
      %p253 = scmp.eq.s32.totalorder %s28, 3
      %p254 = por %p252, %p253
      %p256 = scmp.ne.s32.totalorder %s241, %s255
      %p257 = scmp.eq.s32.totalorder %s28, 0
      %p258 = por %p256, %p257
      %s260 = sadd.s32 %s259, 1
      %p263 = scmp.eq.s32.totalorder %s22, 3
      %p264 = scmp.ne.s32.totalorder %s259, %s261
      %p265 = scmp.eq.s32.totalorder %s22, 0
      %p266 = por %p264, %p265
      %p267 = scmp.ne.s32.totalorder %s259, %s261
      %p268 = scmp.eq.s32.totalorder %s27, 3
      %p269 = por %p267, %p268
      %p270 = scmp.ne.s32.totalorder %s261, %s262
      %p271 = scmp.eq.s32.totalorder %s27, 0
      %p272 = por %p270, %p271
      %p273 = scmp.ne.s32.totalorder %s261, %s262
      %p274 = scmp.eq.s32.totalorder %s28, 3
      %p275 = por %p273, %p274
      %p277 = scmp.ne.s32.totalorder %s262, %s276
      %p278 = scmp.eq.s32.totalorder %s28, 0
      %p279 = por %p277, %p278
      %s280 = ssub.s32 %s29, %s41
      %s281 = ssub.s32 %s30, %s37
      %s282 = sor.u32 %s280, %s281
      %p283 = scmp.eq.s32.totalorder %s282, 0
      %s285 = sadd.s32 %s284, 1
      %s286 = scalar_select %p283, %s284, %s285
      %p289 = pneg %p283
      %p290 = scmp.eq.s32.totalorder %s22, 3
      %p291 = por %p289, %p290
      %p292 = scmp.ne.s32.totalorder %s284, %s287
      %p293 = scmp.eq.s32.totalorder %s22, 0
      %p294 = por %p292, %p293
      %p295 = scmp.ne.s32.totalorder %s284, %s287
      %p296 = scmp.eq.s32.totalorder %s27, 3
      %p297 = por %p295, %p296
      %p298 = scmp.ne.s32.totalorder %s287, %s288
      %p299 = scmp.eq.s32.totalorder %s27, 0
      %p300 = por %p298, %p299
      %p301 = scmp.ne.s32.totalorder %s287, %s288
      %p302 = scmp.eq.s32.totalorder %s28, 3
      %p303 = por %p301, %p302
      %p305 = scmp.ne.s32.totalorder %s288, %s304
      %p306 = scmp.eq.s32.totalorder %s28, 0
      %p307 = por %p305, %p306
      %s308 = ssub.s32 %s29, %s41
      %s309 = ssub.s32 %s30, %s37
      %s310 = sor.u32 %s308, %s309
      %p311 = scmp.eq.s32.totalorder %s310, 0
      %s313 = sadd.s32 %s312, 1
      %s314 = scalar_select %p311, %s312, %s313
      %p317 = pneg %p311
      %p318 = scmp.eq.s32.totalorder %s22, 3
      %p319 = por %p317, %p318
      %p320 = scmp.ne.s32.totalorder %s312, %s315
      %p321 = scmp.eq.s32.totalorder %s22, 0
      %p322 = por %p320, %p321
      %p323 = scmp.ne.s32.totalorder %s312, %s315
      %p324 = scmp.eq.s32.totalorder %s27, 3
      %p325 = por %p323, %p324
      %p326 = scmp.ne.s32.totalorder %s315, %s316
      %p327 = scmp.eq.s32.totalorder %s27, 0
      %p328 = por %p326, %p327
      %p329 = scmp.ne.s32.totalorder %s315, %s316
      %p330 = scmp.eq.s32.totalorder %s28, 3
      %p331 = por %p329, %p330
      %p333 = scmp.ne.s32.totalorder %s316, %s332
      %p334 = scmp.eq.s32.totalorder %s28, 0
      %p335 = por %p333, %p334
      %p336 = scmp.le.s32.totalorder 1, %s22
      %p337 = scmp.lt.s32.totalorder %s22, 5
      %p338 = pnand %p336, %p337
      %p339 = pneg %p338
      // Predicated region
      $region9: #{encoder_forward.1} parent=5 // pred_check
        _
      $region10: #{encoder_forward.1} parent=5 // pred_check_branch
        %341 = sbr.rel (%p338) target = $region12
      $region11: #{encoder_forward.1} parent=5 // pred_region
        %s342 = ssub.s32 %s22, 1
        // Predicated region
        $region13: #{encoder_forward.1} parent=11 // pred_check
          %p343 = pneg %p83
        $region14: #{encoder_forward.1} parent=11 // pred_check_branch
          %345 = sbr.rel (%p343) target = $region16
        $region15: #{encoder_forward.1} parent=11 // pred_region
          _
        $region16: #{encoder_forward.1} parent=11 // pred_fallthru
          _
        // Predicated region
        $region17: #{encoder_forward.1} parent=11 // pred_check
          %p346 = pneg %p104
        $region18: #{encoder_forward.1} parent=11 // pred_check_branch
          %348 = sbr.rel (%p346) target = $region20
        $region19: #{encoder_forward.1} parent=11 // pred_region
          %s350 = ssub.s32 16, 16
          %351 = vsyncadd [#allocation7], %s350
          %s353 = sshll.u32 [#allocation6], 4
          %s354 = int_to_ptr.vmem [resolvable:$true] %s353
          %356 = dma.hbm_to_vmem [thread:$0]  %s2, 16, %s354, [#allocation7]
        $region20: #{encoder_forward.1} parent=11 // pred_fallthru
          _
        // Predicated region
        $region21: #{encoder_forward.1} parent=11 // pred_check
          %p357 = pneg %p125
        $region22: #{encoder_forward.1} parent=11 // pred_check_branch
          %359 = sbr.rel (%p357) target = $region24
        $region23: #{encoder_forward.1} parent=11 // pred_region
          _
        $region24: #{encoder_forward.1} parent=11 // pred_fallthru
          _
        // Predicated region
        $region25: #{encoder_forward.1} parent=11 // pred_check
          %p360 = pneg %p146
        $region26: #{encoder_forward.1} parent=11 // pred_check_branch
          %362 = sbr.rel (%p360) target = $region28
        $region27: #{encoder_forward.1} parent=11 // pred_region
          %s364 = ssub.s32 16, 16
          %365 = vsyncadd [#allocation9], %s364
          %s367 = sshll.u32 [#allocation8], 4
          %s368 = int_to_ptr.vmem [resolvable:$true] %s367
          %370 = dma.hbm_to_vmem [thread:$0]  %s4, 16, %s368, [#allocation9]
        $region28: #{encoder_forward.1} parent=11 // pred_fallthru
          _
        // Predicated region
        $region29: #{encoder_forward.1} parent=11 // pred_check
          %p371 = pneg %p167
        $region30: #{encoder_forward.1} parent=11 // pred_check_branch
          %373 = sbr.rel (%p371) target = $region32
        $region31: #{encoder_forward.1} parent=11 // pred_region
          %s375 = ssub.s32 64, 64
          %376 = vsyncadd [#allocation9], %s375
          %s378 = sshll.u32 [#allocation10], 4
          %s379 = int_to_ptr.vmem [resolvable:$true] %s378
          %381 = dma.hbm_to_vmem [thread:$0]  %s5, 64, %s379, [#allocation9]
        $region32: #{encoder_forward.1} parent=11 // pred_fallthru
          _
        // Predicated region
        $region33: #{encoder_forward.1} parent=11 // pred_check
          %p382 = pneg %p188
        $region34: #{encoder_forward.1} parent=11 // pred_check_branch
          %384 = sbr.rel (%p382) target = $region36
        $region35: #{encoder_forward.1} parent=11 // pred_region
          %s386 = ssub.s32 16, 16
          %387 = vsyncadd [#allocation12], %s386
          %s389 = sshll.u32 [#allocation11], 4
          %s390 = int_to_ptr.vmem [resolvable:$true] %s389
          %392 = dma.hbm_to_vmem [thread:$0]  %s6, 16, %s390, [#allocation12]
        $region36: #{encoder_forward.1} parent=11 // pred_fallthru
          _
        // Predicated region
        $region37: #{encoder_forward.1} parent=11 // pred_check
          %p393 = pneg %p209
        $region38: #{encoder_forward.1} parent=11 // pred_check_branch
          %395 = sbr.rel (%p393) target = $region40
        $region39: #{encoder_forward.1} parent=11 // pred_region
          _
        $region40: #{encoder_forward.1} parent=11 // pred_fallthru
          _
        // Predicated region
        $region41: #{encoder_forward.1} parent=11 // pred_check
          %p396 = pneg %p230
        $region42: #{encoder_forward.1} parent=11 // pred_check_branch
          %398 = sbr.rel (%p396) target = $region44
        $region43: #{encoder_forward.1} parent=11 // pred_region
          _
        $region44: #{encoder_forward.1} parent=11 // pred_fallthru
          _
        // Predicated region
        $region45: #{encoder_forward.1} parent=11 // pred_check
          %p399 = pneg %p251
        $region46: #{encoder_forward.1} parent=11 // pred_check_branch
          %401 = sbr.rel (%p399) target = $region48
        $region47: #{encoder_forward.1} parent=11 // pred_region
          %s403 = ssub.s32 384, 384
          %404 = vsyncadd [#allocation12], %s403
          %s405 = sshll.u32 [#allocation13], 4
          %s406 = int_to_ptr.vmem [resolvable:$true] %s405
          %411 = dma.hbm_to_vmem [thread:$0]  %s9, 384, %s406, [#allocation12], 128, 128, 8
        $region48: #{encoder_forward.1} parent=11 // pred_fallthru
          _
        // Predicated region
        $region49: #{encoder_forward.1} parent=11 // pred_check
          %p412 = pneg %p272
        $region50: #{encoder_forward.1} parent=11 // pred_check_branch
          %414 = sbr.rel (%p412) target = $region52
        $region51: #{encoder_forward.1} parent=11 // pred_region
          _
        $region52: #{encoder_forward.1} parent=11 // pred_fallthru
          _
      $region12: #{encoder_forward.1} parent=5 // pred_fallthru
        _
      %p415 = scmp.lt.s32.totalorder %s22, 4
      // Predicated region
      $region53: #{encoder_forward.1} parent=5 // pred_check
        %p416 = pneg %p415
      $region54: #{encoder_forward.1} parent=5 // pred_check_branch
        %418 = sbr.rel (%p416) target = $region56
      $region55: #{encoder_forward.1} parent=5 // pred_region
        // Predicated region
        $region57: #{encoder_forward.1} parent=55 // pred_check
          %p419 = pneg %p56
        $region58: #{encoder_forward.1} parent=55 // pred_check_branch
          %421 = sbr.rel (%p419) target = $region60
        $region59: #{encoder_forward.1} parent=55 // pred_region
          %p422 = scmp.lt.s32.totalorder %s29, 1
          %s423 = scalar_select %p422, %s29, 1
          %p424 = scmp.lt.s32.totalorder %s30, 1
          %s425 = scalar_select %p424, %s30, 1
          %s426 = smul.addr %s423, 2
          %s427 = sadd.s32 %s425, %s426
          %s428 = smul.addr %s427, 8
          %s429 = scalar_lea.vmem %s0, %s428
        $region60: #{encoder_forward.1} parent=55 // pred_fallthru
          _
      $region56: #{encoder_forward.1} parent=5 // pred_fallthru
        _
      %p430 = scmp.le.s32.totalorder 1, %s22
      %p431 = scmp.lt.s32.totalorder %s22, 5
      %p432 = pnand %p430, %p431
      %p433 = pneg %p432
      // Predicated region
      $region61: #{encoder_forward.1} parent=5 // pred_check
        _
      $region62: #{encoder_forward.1} parent=5 // pred_check_branch
        %435 = sbr.rel (%p432) target = $region64
      $region63: #{encoder_forward.1} parent=5 // pred_region
        %s436 = ssub.s32 %s22, 1
        // Predicated region
        $region65: #{encoder_forward.1} parent=63 // pred_check
          %p437 = pneg %p104
        $region66: #{encoder_forward.1} parent=63 // pred_check_branch
          %439 = sbr.rel (%p437) target = $region68
        $region67: #{encoder_forward.1} parent=63 // pred_region
          %440 = dma.done [#allocation7], 16
        $region68: #{encoder_forward.1} parent=63 // pred_fallthru
          _
        // Predicated region
        $region69: #{encoder_forward.1} parent=63 // pred_check
          %p441 = pneg %p146
        $region70: #{encoder_forward.1} parent=63 // pred_check_branch
          %443 = sbr.rel (%p441) target = $region72
        $region71: #{encoder_forward.1} parent=63 // pred_region
          %444 = dma.done [#allocation9], 16
        $region72: #{encoder_forward.1} parent=63 // pred_fallthru
          _
        // Predicated region
        $region73: #{encoder_forward.1} parent=63 // pred_check
          %p445 = pneg %p167
        $region74: #{encoder_forward.1} parent=63 // pred_check_branch
          %447 = sbr.rel (%p445) target = $region76
        $region75: #{encoder_forward.1} parent=63 // pred_region
          %448 = dma.done [#allocation9], 64
        $region76: #{encoder_forward.1} parent=63 // pred_fallthru
          _
        // Predicated region
        $region77: #{encoder_forward.1} parent=63 // pred_check
          %p449 = pneg %p188
        $region78: #{encoder_forward.1} parent=63 // pred_check_branch
          %451 = sbr.rel (%p449) target = $region80
        $region79: #{encoder_forward.1} parent=63 // pred_region
          %452 = dma.done [#allocation12], 16
        $region80: #{encoder_forward.1} parent=63 // pred_fallthru
          _
        // Predicated region
        $region81: #{encoder_forward.1} parent=63 // pred_check
          %p453 = pneg %p251
        $region82: #{encoder_forward.1} parent=63 // pred_check_branch
          %455 = sbr.rel (%p453) target = $region84
        $region83: #{encoder_forward.1} parent=63 // pred_region
          %456 = dma.done [#allocation12], 384
        $region84: #{encoder_forward.1} parent=63 // pred_fallthru
          _
        %p457 = scmp.lt.s32.totalorder %s31, 1
        %s458 = scalar_select %p457, %s31, 1
        %p459 = scmp.lt.s32.totalorder %s32, 1
        %s460 = scalar_select %p459, %s32, 1
        %s461 = smul.addr %s458, 2
        %s462 = sadd.s32 %s460, %s461
        %s463 = smul.addr %s462, 8
        %s464 = scalar_lea.vmem %s0, %s463
        %p465 = pneg %p62
        %p466 = pneg %p59
        %p467 = pneg %p83
        %p468 = pneg %p80
        %p469 = pneg %p104
        %p470 = pneg %p101
        %p471 = pneg %p125
        %p472 = pneg %p122
        %p473 = pneg %p146
        %p474 = pneg %p143
        %p475 = pneg %p167
        %p476 = pneg %p164
        %p477 = pneg %p188
        %p478 = pneg %p185
        %p479 = pneg %p209
        %p480 = pneg %p206
        %p481 = pneg %p230
        %p482 = pneg %p227
        %p483 = pneg %p251
        %p484 = pneg %p248
        %p485 = pneg %p272
        %p486 = pneg %p269
        %p487 = pneg %p300
        %p488 = pneg %p297
        %p489 = scmp.lt.s32.totalorder %s31, 1
        %s490 = scalar_select %p489, %s31, 1
        %p491 = scmp.lt.s32.totalorder %s32, 1
        %s492 = scalar_select %p491, %s32, 1
        %s493 = smul.addr %s490, 2
        %s494 = sadd.s32 %s492, %s493
        %s495 = smul.addr %s494, 8
        %s496 = scalar_lea.vmem %s11, %s495
        %p497 = pneg %p328
        %p498 = pneg %p325
        %p499 = scmp.lt.s32.totalorder %s31, 1
        %s500 = scalar_select %p499, %s31, 1
        %p501 = scmp.lt.s32.totalorder %s32, 1
        %s502 = scalar_select %p501, %s32, 1
        %s503 = smul.addr %s500, 2
        %s504 = sadd.s32 %s502, %s503
        %s505 = smul.addr %s504, 8
        %s506 = scalar_lea.vmem %s12, %s505
        %p507 = scmp.lt.s32.totalorder %s31, 1
        %s508 = scalar_select %p507, %s31, 1
        %p509 = scmp.lt.s32.totalorder %s32, 1
        %s510 = scalar_select %p509, %s32, 1
        %s511 = smul.addr %s508, 2
        %s512 = sadd.s32 %s510, %s511
        %s513 = smul.addr %s512, 8
        %s514 = scalar_lea.vmem %s0, %s513
        %p515 = scmp.lt.s32.totalorder %s31, 1
        %s516 = scalar_select %p515, %s31, 1
        %p517 = scmp.lt.s32.totalorder %s32, 1
        %s518 = scalar_select %p517, %s32, 1
        %s519 = smul.addr %s516, 2
        %s520 = sadd.s32 %s518, %s519
        %s521 = smul.addr %s520, 8
        %s522 = scalar_lea.vmem %s11, %s521
        %p523 = scmp.lt.s32.totalorder %s31, 1
        %s524 = scalar_select %p523, %s31, 1
        %p525 = scmp.lt.s32.totalorder %s32, 1
        %s526 = scalar_select %p525, %s32, 1
        %s527 = smul.addr %s524, 2
        %s528 = sadd.s32 %s526, %s527
        %s529 = smul.addr %s528, 8
        %s530 = scalar_lea.vmem %s12, %s529
        %v531 = vld [vmem:[%s514] sm:$0xff]
        %p532 = scmp.eq.s32.totalorder %s32, 0
        // Predicated region
        $region85: #{encoder_forward.1} parent=63 // pred_check
          %p533 = pneg %p532
        $region86: #{encoder_forward.1} parent=63 // pred_check_branch
          %535 = sbr.rel (%p533) target = $region88
        $region87: #{encoder_forward.1} parent=63 // pred_region
          %vm536 = vcmask 25600
          %537 = vst.msk [vmem:[#allocation2 + $0x6] sm:$0x3] %vm536, 0.0
          %vm538 = vcmask 58368
          %539 = vst.msk [vmem:[#allocation3 + $0x6] sm:$0x3] %vm538, 0.0
        $region88: #{encoder_forward.1} parent=63 // pred_fallthru
          _
        %vm540 = vcmask 31744
        %541 = vst.msk [vmem:[#allocation2 + $0x8] sm:$0xff] %vm540, %v531
        %v542 = vld [vmem:[#allocation6] sm:$0x1]
        %v543 = vld [vmem:[#allocation2 + $0x6] sm:$0xff]
        %v544 = vld [vmem:[%s1] sm:$0xf]
        %v546 = vsel %vm540, %v543, 0
        %vm548 = vcmask 1043456
        %v550 = vsel %vm548, %v544, 0
        %552 = vmatprep.subr.mxu0 0.0
        %553 = vmatpush1.msra.mxu0 0.0
        %554 = vmatprep.subr.mxu0 0.0
        %555 = vmatpush1.msra.mxu0 0.0
        %556 = vmatprep.subr.mxu0 0.0
        %557 = vmatpush1.msra.mxu0 0.0
        %558 = vmatprep.subr.mxu0 0.0
        %559 = vmatpush1.msra.mxu0 0.0
        %560 = vmatprep.subr.mxu0 0.0
        %561 = vmatpush1.msra.mxu0 0.0
        %562 = vmatprep.subr.mxu0 0.0
        %563 = vmatpush1.msra.mxu0 0.0
        %564 = vmatprep.subr.mxu0 0.0
        %565 = vmatpush1.msra.mxu0 0.0
        %566 = vmatprep.subr.mxu0 0.0
        %567 = vmatpush1.msra.mxu0 0.0
        %568 = vmatprep.subr.mxu0 0.0
        %569 = vmatpush1.msra.mxu0 0.0
        %570 = vmatprep.subr.mxu0 0.0
        %571 = vmatpush1.msra.mxu0 0.0
        %572 = vmatprep.subr.mxu0 0.0
        %573 = vmatpush1.msra.mxu0 0.0
        %574 = vmatprep.subr.mxu0 0.0
        %575 = vmatpush1.msra.mxu0 0.0
        %576 = vmatprep.subr.mxu0 0.0
        %577 = vmatpush1.msra.mxu0 0.0
        %578 = vmatprep.subr.mxu0 0.0
        %579 = vmatpush1.msra.mxu0 0.0
        %580 = vmatprep.subr.mxu0 0.0
        %581 = vmatpush1.msra.mxu0 0.0
        %582 = vmatprep.subr.mxu0 0.0
        %583 = vmatpush1.msra.mxu0 %v550
        %584 = vmatprep.subr.mxu0 0.0
        %585 = vmatpush2.msra.mxu0 0.0
        %586 = vmatprep.subr.mxu0 0.0
        %587 = vmatpush2.msra.mxu0 0.0
        %588 = vmatprep.subr.mxu0 0.0
        %589 = vmatpush2.msra.mxu0 0.0
        %590 = vmatprep.subr.mxu0 0.0
        %591 = vmatpush2.msra.mxu0 0.0
        %592 = vmatprep.subr.mxu0 0.0
        %593 = vmatpush2.msra.mxu0 0.0
        %594 = vmatprep.subr.mxu0 0.0
        %595 = vmatpush2.msra.mxu0 0.0
        %596 = vmatprep.subr.mxu0 0.0
        %597 = vmatpush2.msra.mxu0 0.0
        %598 = vmatprep.subr.mxu0 0.0
        %599 = vmatpush2.msra.mxu0 0.0
        %600 = vmatprep.subr.mxu0 0.0
        %601 = vmatpush2.msra.mxu0 0.0
        %602 = vmatprep.subr.mxu0 0.0
        %603 = vmatpush2.msra.mxu0 0.0
        %604 = vmatprep.subr.mxu0 0.0
        %605 = vmatpush2.msra.mxu0 0.0
        %606 = vmatprep.subr.mxu0 0.0
        %607 = vmatpush2.msra.mxu0 0.0
        %608 = vmatprep.subr.mxu0 0.0
        %609 = vmatpush2.msra.mxu0 0.0
        %610 = vmatprep.subr.mxu0 0.0
        %611 = vmatpush2.msra.mxu0 0.0
        %612 = vmatprep.subr.mxu0 0.0
        %613 = vmatpush2.msra.mxu0 0.0
        %614 = vmatprep.subr.mxu0 0.0
        %615 = vmatpush2.msra.mxu0 0.0
        %616 = vmatprep.mubr.f32.mxu0 0.0
        %617 = vmatmul.mubr.f32.gmra.mxu0 %v546
        %v618 = vpop.f32.mrf.mxu0
        %v619 = vadd.f32 0.0, %v618
        %v620 = vpop.f32.mrf.mxu0
        %621 = vdwg.mxu0
        %v623 = vlaneseq
        %v624 = vshrl.u32 %v623, 7
        %v625 = vsub.s32 0, %v624
        %v626 = vrot.slane %v542, %v625
        %v628 = vadd.f32 %v626, %v619
        %v629 = vld [vmem:[#allocation2 + $0x7] sm:$0xff]
        %s630 = scalar_lea.vmem %s1, 4
        %v631 = vld [vmem:[%s630] sm:$0xf]
        %v633 = vsel %vm540, %v629, 0
        %v636 = vsel %vm548, %v631, 0
        %638 = vmatprep.subr.mxu0 0.0
        %639 = vmatpush1.msra.mxu0 0.0
        %640 = vmatprep.subr.mxu0 0.0
        %641 = vmatpush1.msra.mxu0 0.0
        %642 = vmatprep.subr.mxu0 0.0
        %643 = vmatpush1.msra.mxu0 0.0
        %644 = vmatprep.subr.mxu0 0.0
        %645 = vmatpush1.msra.mxu0 0.0
        %646 = vmatprep.subr.mxu0 0.0
        %647 = vmatpush1.msra.mxu0 0.0
        %648 = vmatprep.subr.mxu0 0.0
        %649 = vmatpush1.msra.mxu0 0.0
        %650 = vmatprep.subr.mxu0 0.0
        %651 = vmatpush1.msra.mxu0 0.0
        %652 = vmatprep.subr.mxu0 0.0
        %653 = vmatpush1.msra.mxu0 0.0
        %654 = vmatprep.subr.mxu0 0.0
        %655 = vmatpush1.msra.mxu0 0.0
        %656 = vmatprep.subr.mxu0 0.0
        %657 = vmatpush1.msra.mxu0 0.0
        %658 = vmatprep.subr.mxu0 0.0
        %659 = vmatpush1.msra.mxu0 0.0
        %660 = vmatprep.subr.mxu0 0.0
        %661 = vmatpush1.msra.mxu0 0.0
        %662 = vmatprep.subr.mxu0 0.0
        %663 = vmatpush1.msra.mxu0 0.0
        %664 = vmatprep.subr.mxu0 0.0
        %665 = vmatpush1.msra.mxu0 0.0
        %666 = vmatprep.subr.mxu0 0.0
        %667 = vmatpush1.msra.mxu0 0.0
        %668 = vmatprep.subr.mxu0 0.0
        %669 = vmatpush1.msra.mxu0 %v636
        %670 = vmatprep.subr.mxu0 0.0
        %671 = vmatpush2.msra.mxu0 0.0
        %672 = vmatprep.subr.mxu0 0.0
        %673 = vmatpush2.msra.mxu0 0.0
        %674 = vmatprep.subr.mxu0 0.0
        %675 = vmatpush2.msra.mxu0 0.0
        %676 = vmatprep.subr.mxu0 0.0
        %677 = vmatpush2.msra.mxu0 0.0
        %678 = vmatprep.subr.mxu0 0.0
        %679 = vmatpush2.msra.mxu0 0.0
        %680 = vmatprep.subr.mxu0 0.0
        %681 = vmatpush2.msra.mxu0 0.0
        %682 = vmatprep.subr.mxu0 0.0
        %683 = vmatpush2.msra.mxu0 0.0
        %684 = vmatprep.subr.mxu0 0.0
        %685 = vmatpush2.msra.mxu0 0.0
        %686 = vmatprep.subr.mxu0 0.0
        %687 = vmatpush2.msra.mxu0 0.0
        %688 = vmatprep.subr.mxu0 0.0
        %689 = vmatpush2.msra.mxu0 0.0
        %690 = vmatprep.subr.mxu0 0.0
        %691 = vmatpush2.msra.mxu0 0.0
        %692 = vmatprep.subr.mxu0 0.0
        %693 = vmatpush2.msra.mxu0 0.0
        %694 = vmatprep.subr.mxu0 0.0
        %695 = vmatpush2.msra.mxu0 0.0
        %696 = vmatprep.subr.mxu0 0.0
        %697 = vmatpush2.msra.mxu0 0.0
        %698 = vmatprep.subr.mxu0 0.0
        %699 = vmatpush2.msra.mxu0 0.0
        %700 = vmatprep.subr.mxu0 0.0
        %701 = vmatpush2.msra.mxu0 0.0
        %702 = vmatprep.mubr.f32.mxu0 0.0
        %703 = vmatmul.mubr.f32.gmra.mxu0 %v633
        %v704 = vpop.f32.mrf.mxu0
        %v705 = vadd.f32 0.0, %v704
        %v706 = vpop.f32.mrf.mxu0
        %707 = vdwg.mxu0
        %v708 = vadd.f32 %v628, %v705
        %v709 = vld [vmem:[#allocation2 + $0x8] sm:$0xff]
        %s710 = scalar_lea.vmem %s1, 8
        %v711 = vld [vmem:[%s710] sm:$0xf]
        %v713 = vsel %vm540, %v709, 0
        %v716 = vsel %vm548, %v711, 0
        %718 = vmatprep.subr.mxu0 0.0
        %719 = vmatpush1.msra.mxu0 0.0
        %720 = vmatprep.subr.mxu0 0.0
        %721 = vmatpush1.msra.mxu0 0.0
        %722 = vmatprep.subr.mxu0 0.0
        %723 = vmatpush1.msra.mxu0 0.0
        %724 = vmatprep.subr.mxu0 0.0
        %725 = vmatpush1.msra.mxu0 0.0
        %726 = vmatprep.subr.mxu0 0.0
        %727 = vmatpush1.msra.mxu0 0.0
        %728 = vmatprep.subr.mxu0 0.0
        %729 = vmatpush1.msra.mxu0 0.0
        %730 = vmatprep.subr.mxu0 0.0
        %731 = vmatpush1.msra.mxu0 0.0
        %732 = vmatprep.subr.mxu0 0.0
        %733 = vmatpush1.msra.mxu0 0.0
        %734 = vmatprep.subr.mxu0 0.0
        %735 = vmatpush1.msra.mxu0 0.0
        %736 = vmatprep.subr.mxu0 0.0
        %737 = vmatpush1.msra.mxu0 0.0
        %738 = vmatprep.subr.mxu0 0.0
        %739 = vmatpush1.msra.mxu0 0.0
        %740 = vmatprep.subr.mxu0 0.0
        %741 = vmatpush1.msra.mxu0 0.0
        %742 = vmatprep.subr.mxu0 0.0
        %743 = vmatpush1.msra.mxu0 0.0
        %744 = vmatprep.subr.mxu0 0.0
        %745 = vmatpush1.msra.mxu0 0.0
        %746 = vmatprep.subr.mxu0 0.0
        %747 = vmatpush1.msra.mxu0 0.0
        %748 = vmatprep.subr.mxu0 0.0
        %749 = vmatpush1.msra.mxu0 %v716
        %750 = vmatprep.subr.mxu0 0.0
        %751 = vmatpush2.msra.mxu0 0.0
        %752 = vmatprep.subr.mxu0 0.0
        %753 = vmatpush2.msra.mxu0 0.0
        %754 = vmatprep.subr.mxu0 0.0
        %755 = vmatpush2.msra.mxu0 0.0
        %756 = vmatprep.subr.mxu0 0.0
        %757 = vmatpush2.msra.mxu0 0.0
        %758 = vmatprep.subr.mxu0 0.0
        %759 = vmatpush2.msra.mxu0 0.0
        %760 = vmatprep.subr.mxu0 0.0
        %761 = vmatpush2.msra.mxu0 0.0
        %762 = vmatprep.subr.mxu0 0.0
        %763 = vmatpush2.msra.mxu0 0.0
        %764 = vmatprep.subr.mxu0 0.0
        %765 = vmatpush2.msra.mxu0 0.0
        %766 = vmatprep.subr.mxu0 0.0
        %767 = vmatpush2.msra.mxu0 0.0
        %768 = vmatprep.subr.mxu0 0.0
        %769 = vmatpush2.msra.mxu0 0.0
        %770 = vmatprep.subr.mxu0 0.0
        %771 = vmatpush2.msra.mxu0 0.0
        %772 = vmatprep.subr.mxu0 0.0
        %773 = vmatpush2.msra.mxu0 0.0
        %774 = vmatprep.subr.mxu0 0.0
        %775 = vmatpush2.msra.mxu0 0.0
        %776 = vmatprep.subr.mxu0 0.0
        %777 = vmatpush2.msra.mxu0 0.0
        %778 = vmatprep.subr.mxu0 0.0
        %779 = vmatpush2.msra.mxu0 0.0
        %780 = vmatprep.subr.mxu0 0.0
        %781 = vmatpush2.msra.mxu0 0.0
        %782 = vmatprep.mubr.f32.mxu0 0.0
        %783 = vmatmul.mubr.f32.gmra.mxu0 %v713
        %v784 = vpop.f32.mrf.mxu0
        %v785 = vadd.f32 0.0, %v784
        %v786 = vpop.f32.mrf.mxu0
        %787 = vdwg.mxu0
        %v788 = vadd.f32 %v708, %v785
        %v789 = vmax.f32 %v788, 0.0
        %vm790 = vcmask 64512
        %791 = vst.msk [vmem:[#allocation3 + $0x8] sm:$0xff] %vm790, %v789
        %v792 = vld [vmem:[#allocation8] sm:$0x1]
        %v793 = vld [vmem:[#allocation3 + $0x6] sm:$0xff]
        %v794 = vld [vmem:[%s3] sm:$0xff]
        %v796 = vsel %vm790, %v793, 0
        %798 = vmatprep.subr.mxu0 0.0
        %799 = vmatpush1.msra.mxu0 0.0
        %800 = vmatprep.subr.mxu0 0.0
        %801 = vmatpush1.msra.mxu0 0.0
        %802 = vmatprep.subr.mxu0 0.0
        %803 = vmatpush1.msra.mxu0 0.0
        %804 = vmatprep.subr.mxu0 0.0
        %805 = vmatpush1.msra.mxu0 0.0
        %806 = vmatprep.subr.mxu0 0.0
        %807 = vmatpush1.msra.mxu0 0.0
        %808 = vmatprep.subr.mxu0 0.0
        %809 = vmatpush1.msra.mxu0 0.0
        %810 = vmatprep.subr.mxu0 0.0
        %811 = vmatpush1.msra.mxu0 0.0
        %812 = vmatprep.subr.mxu0 0.0
        %813 = vmatpush1.msra.mxu0 0.0
        %814 = vmatprep.subr.mxu0 0.0
        %815 = vmatpush1.msra.mxu0 0.0
        %816 = vmatprep.subr.mxu0 0.0
        %817 = vmatpush1.msra.mxu0 0.0
        %818 = vmatprep.subr.mxu0 0.0
        %819 = vmatpush1.msra.mxu0 0.0
        %820 = vmatprep.subr.mxu0 0.0
        %821 = vmatpush1.msra.mxu0 0.0
        %822 = vmatprep.subr.mxu0 0.0
        %823 = vmatpush1.msra.mxu0 0.0
        %824 = vmatprep.subr.mxu0 0.0
        %825 = vmatpush1.msra.mxu0 0.0
        %826 = vmatprep.subr.mxu0 0.0
        %827 = vmatpush1.msra.mxu0 0.0
        %828 = vmatprep.subr.mxu0 0.0
        %829 = vmatpush1.msra.mxu0 %v794
        %830 = vmatprep.subr.mxu0 0.0
        %831 = vmatpush2.msra.mxu0 0.0
        %832 = vmatprep.subr.mxu0 0.0
        %833 = vmatpush2.msra.mxu0 0.0
        %834 = vmatprep.subr.mxu0 0.0
        %835 = vmatpush2.msra.mxu0 0.0
        %836 = vmatprep.subr.mxu0 0.0
        %837 = vmatpush2.msra.mxu0 0.0
        %838 = vmatprep.subr.mxu0 0.0
        %839 = vmatpush2.msra.mxu0 0.0
        %840 = vmatprep.subr.mxu0 0.0
        %841 = vmatpush2.msra.mxu0 0.0
        %842 = vmatprep.subr.mxu0 0.0
        %843 = vmatpush2.msra.mxu0 0.0
        %844 = vmatprep.subr.mxu0 0.0
        %845 = vmatpush2.msra.mxu0 0.0
        %846 = vmatprep.subr.mxu0 0.0
        %847 = vmatpush2.msra.mxu0 0.0
        %848 = vmatprep.subr.mxu0 0.0
        %849 = vmatpush2.msra.mxu0 0.0
        %850 = vmatprep.subr.mxu0 0.0
        %851 = vmatpush2.msra.mxu0 0.0
        %852 = vmatprep.subr.mxu0 0.0
        %853 = vmatpush2.msra.mxu0 0.0
        %854 = vmatprep.subr.mxu0 0.0
        %855 = vmatpush2.msra.mxu0 0.0
        %856 = vmatprep.subr.mxu0 0.0
        %857 = vmatpush2.msra.mxu0 0.0
        %858 = vmatprep.subr.mxu0 0.0
        %859 = vmatpush2.msra.mxu0 0.0
        %860 = vmatprep.subr.mxu0 0.0
        %861 = vmatpush2.msra.mxu0 0.0
        %862 = vmatprep.mubr.f32.mxu0 0.0
        %863 = vmatmul.mubr.f32.gmra.mxu0 %v796
        %v864 = vpop.f32.mrf.mxu0
        %v865 = vadd.f32 0.0, %v864
        %v866 = vpop.f32.mrf.mxu0
        %867 = vdwg.mxu0
        %v869 = vlaneseq
        %v870 = vshrl.u32 %v869, 7
        %v871 = vsub.s32 0, %v870
        %v872 = vrot.slane %v792, %v871
        %v874 = vadd.f32 %v872, %v865
        %v875 = vld [vmem:[#allocation3 + $0x7] sm:$0xff]
        %s876 = scalar_lea.vmem %s3, 8
        %v877 = vld [vmem:[%s876] sm:$0xff]
        %v879 = vsel %vm790, %v875, 0
        %881 = vmatprep.subr.mxu0 0.0
        %882 = vmatpush1.msra.mxu0 0.0
        %883 = vmatprep.subr.mxu0 0.0
        %884 = vmatpush1.msra.mxu0 0.0
        %885 = vmatprep.subr.mxu0 0.0
        %886 = vmatpush1.msra.mxu0 0.0
        %887 = vmatprep.subr.mxu0 0.0
        %888 = vmatpush1.msra.mxu0 0.0
        %889 = vmatprep.subr.mxu0 0.0
        %890 = vmatpush1.msra.mxu0 0.0
        %891 = vmatprep.subr.mxu0 0.0
        %892 = vmatpush1.msra.mxu0 0.0
        %893 = vmatprep.subr.mxu0 0.0
        %894 = vmatpush1.msra.mxu0 0.0
        %895 = vmatprep.subr.mxu0 0.0
        %896 = vmatpush1.msra.mxu0 0.0
        %897 = vmatprep.subr.mxu0 0.0
        %898 = vmatpush1.msra.mxu0 0.0
        %899 = vmatprep.subr.mxu0 0.0
        %900 = vmatpush1.msra.mxu0 0.0
        %901 = vmatprep.subr.mxu0 0.0
        %902 = vmatpush1.msra.mxu0 0.0
        %903 = vmatprep.subr.mxu0 0.0
        %904 = vmatpush1.msra.mxu0 0.0
        %905 = vmatprep.subr.mxu0 0.0
        %906 = vmatpush1.msra.mxu0 0.0
        %907 = vmatprep.subr.mxu0 0.0
        %908 = vmatpush1.msra.mxu0 0.0
        %909 = vmatprep.subr.mxu0 0.0
        %910 = vmatpush1.msra.mxu0 0.0
        %911 = vmatprep.subr.mxu0 0.0
        %912 = vmatpush1.msra.mxu0 %v877
        %913 = vmatprep.subr.mxu0 0.0
        %914 = vmatpush2.msra.mxu0 0.0
        %915 = vmatprep.subr.mxu0 0.0
        %916 = vmatpush2.msra.mxu0 0.0
        %917 = vmatprep.subr.mxu0 0.0
        %918 = vmatpush2.msra.mxu0 0.0
        %919 = vmatprep.subr.mxu0 0.0
        %920 = vmatpush2.msra.mxu0 0.0
        %921 = vmatprep.subr.mxu0 0.0
        %922 = vmatpush2.msra.mxu0 0.0
        %923 = vmatprep.subr.mxu0 0.0
        %924 = vmatpush2.msra.mxu0 0.0
        %925 = vmatprep.subr.mxu0 0.0
        %926 = vmatpush2.msra.mxu0 0.0
        %927 = vmatprep.subr.mxu0 0.0
        %928 = vmatpush2.msra.mxu0 0.0
        %929 = vmatprep.subr.mxu0 0.0
        %930 = vmatpush2.msra.mxu0 0.0
        %931 = vmatprep.subr.mxu0 0.0
        %932 = vmatpush2.msra.mxu0 0.0
        %933 = vmatprep.subr.mxu0 0.0
        %934 = vmatpush2.msra.mxu0 0.0
        %935 = vmatprep.subr.mxu0 0.0
        %936 = vmatpush2.msra.mxu0 0.0
        %937 = vmatprep.subr.mxu0 0.0
        %938 = vmatpush2.msra.mxu0 0.0
        %939 = vmatprep.subr.mxu0 0.0
        %940 = vmatpush2.msra.mxu0 0.0
        %941 = vmatprep.subr.mxu0 0.0
        %942 = vmatpush2.msra.mxu0 0.0
        %943 = vmatprep.subr.mxu0 0.0
        %944 = vmatpush2.msra.mxu0 0.0
        %945 = vmatprep.mubr.f32.mxu0 0.0
        %946 = vmatmul.mubr.f32.gmra.mxu0 %v879
        %v947 = vpop.f32.mrf.mxu0
        %v948 = vadd.f32 0.0, %v947
        %v949 = vpop.f32.mrf.mxu0
        %950 = vdwg.mxu0
        %v951 = vadd.f32 %v874, %v948
        %v952 = vld [vmem:[#allocation3 + $0x8] sm:$0xff]
        %s953 = scalar_lea.vmem %s3, 16
        %v954 = vld [vmem:[%s953] sm:$0xff]
        %v956 = vsel %vm790, %v952, 0
        %958 = vmatprep.subr.mxu0 0.0
        %959 = vmatpush1.msra.mxu0 0.0
        %960 = vmatprep.subr.mxu0 0.0
        %961 = vmatpush1.msra.mxu0 0.0
        %962 = vmatprep.subr.mxu0 0.0
        %963 = vmatpush1.msra.mxu0 0.0
        %964 = vmatprep.subr.mxu0 0.0
        %965 = vmatpush1.msra.mxu0 0.0
        %966 = vmatprep.subr.mxu0 0.0
        %967 = vmatpush1.msra.mxu0 0.0
        %968 = vmatprep.subr.mxu0 0.0
        %969 = vmatpush1.msra.mxu0 0.0
        %970 = vmatprep.subr.mxu0 0.0
        %971 = vmatpush1.msra.mxu0 0.0
        %972 = vmatprep.subr.mxu0 0.0
        %973 = vmatpush1.msra.mxu0 0.0
        %974 = vmatprep.subr.mxu0 0.0
        %975 = vmatpush1.msra.mxu0 0.0
        %976 = vmatprep.subr.mxu0 0.0
        %977 = vmatpush1.msra.mxu0 0.0
        %978 = vmatprep.subr.mxu0 0.0
        %979 = vmatpush1.msra.mxu0 0.0
        %980 = vmatprep.subr.mxu0 0.0
        %981 = vmatpush1.msra.mxu0 0.0
        %982 = vmatprep.subr.mxu0 0.0
        %983 = vmatpush1.msra.mxu0 0.0
        %984 = vmatprep.subr.mxu0 0.0
        %985 = vmatpush1.msra.mxu0 0.0
        %986 = vmatprep.subr.mxu0 0.0
        %987 = vmatpush1.msra.mxu0 0.0
        %988 = vmatprep.subr.mxu0 0.0
        %989 = vmatpush1.msra.mxu0 %v954
        %990 = vmatprep.subr.mxu0 0.0
        %991 = vmatpush2.msra.mxu0 0.0
        %992 = vmatprep.subr.mxu0 0.0
        %993 = vmatpush2.msra.mxu0 0.0
        %994 = vmatprep.subr.mxu0 0.0
        %995 = vmatpush2.msra.mxu0 0.0
        %996 = vmatprep.subr.mxu0 0.0
        %997 = vmatpush2.msra.mxu0 0.0
        %998 = vmatprep.subr.mxu0 0.0
        %999 = vmatpush2.msra.mxu0 0.0
        %1000 = vmatprep.subr.mxu0 0.0
        %1001 = vmatpush2.msra.mxu0 0.0
        %1002 = vmatprep.subr.mxu0 0.0
        %1003 = vmatpush2.msra.mxu0 0.0
        %1004 = vmatprep.subr.mxu0 0.0
        %1005 = vmatpush2.msra.mxu0 0.0
        %1006 = vmatprep.subr.mxu0 0.0
        %1007 = vmatpush2.msra.mxu0 0.0
        %1008 = vmatprep.subr.mxu0 0.0
        %1009 = vmatpush2.msra.mxu0 0.0
        %1010 = vmatprep.subr.mxu0 0.0
        %1011 = vmatpush2.msra.mxu0 0.0
        %1012 = vmatprep.subr.mxu0 0.0
        %1013 = vmatpush2.msra.mxu0 0.0
        %1014 = vmatprep.subr.mxu0 0.0
        %1015 = vmatpush2.msra.mxu0 0.0
        %1016 = vmatprep.subr.mxu0 0.0
        %1017 = vmatpush2.msra.mxu0 0.0
        %1018 = vmatprep.subr.mxu0 0.0
        %1019 = vmatpush2.msra.mxu0 0.0
        %1020 = vmatprep.subr.mxu0 0.0
        %1021 = vmatpush2.msra.mxu0 0.0
        %1022 = vmatprep.mubr.f32.mxu0 0.0
        %1023 = vmatmul.mubr.f32.gmra.mxu0 %v956
        %v1024 = vpop.f32.mrf.mxu0
        %v1025 = vadd.f32 0.0, %v1024
        %v1026 = vpop.f32.mrf.mxu0
        %1027 = vdwg.mxu0
        %v1028 = vadd.f32 %v951, %v1025
        %v1029 = vld [vmem:[#allocation10] sm:$0xf]
        %v1030 = vld [vmem:[#allocation11] sm:$0x1]
        %v1032 = vlaneseq
        %v1033 = vshrl.u32 %v1032, 7
        %v1034 = vsub.s32 0, %v1033
        %v1035 = vrot.slane %v1030, %v1034
        %v1038 = vsel %vm540, %v531, 0
        %v1041 = vsel %vm548, %v1029, 0
        %1043 = vmatprep.subr.mxu0 0.0
        %1044 = vmatpush1.msra.mxu0 0.0
        %1045 = vmatprep.subr.mxu0 0.0
        %1046 = vmatpush1.msra.mxu0 0.0
        %1047 = vmatprep.subr.mxu0 0.0
        %1048 = vmatpush1.msra.mxu0 0.0
        %1049 = vmatprep.subr.mxu0 0.0
        %1050 = vmatpush1.msra.mxu0 0.0
        %1051 = vmatprep.subr.mxu0 0.0
        %1052 = vmatpush1.msra.mxu0 0.0
        %1053 = vmatprep.subr.mxu0 0.0
        %1054 = vmatpush1.msra.mxu0 0.0
        %1055 = vmatprep.subr.mxu0 0.0
        %1056 = vmatpush1.msra.mxu0 0.0
        %1057 = vmatprep.subr.mxu0 0.0
        %1058 = vmatpush1.msra.mxu0 0.0
        %1059 = vmatprep.subr.mxu0 0.0
        %1060 = vmatpush1.msra.mxu0 0.0
        %1061 = vmatprep.subr.mxu0 0.0
        %1062 = vmatpush1.msra.mxu0 0.0
        %1063 = vmatprep.subr.mxu0 0.0
        %1064 = vmatpush1.msra.mxu0 0.0
        %1065 = vmatprep.subr.mxu0 0.0
        %1066 = vmatpush1.msra.mxu0 0.0
        %1067 = vmatprep.subr.mxu0 0.0
        %1068 = vmatpush1.msra.mxu0 0.0
        %1069 = vmatprep.subr.mxu0 0.0
        %1070 = vmatpush1.msra.mxu0 0.0
        %1071 = vmatprep.subr.mxu0 0.0
        %1072 = vmatpush1.msra.mxu0 0.0
        %1073 = vmatprep.subr.mxu0 0.0
        %1074 = vmatpush1.msra.mxu0 %v1041
        %1075 = vmatprep.subr.mxu0 0.0
        %1076 = vmatpush2.msra.mxu0 0.0
        %1077 = vmatprep.subr.mxu0 0.0
        %1078 = vmatpush2.msra.mxu0 0.0
        %1079 = vmatprep.subr.mxu0 0.0
        %1080 = vmatpush2.msra.mxu0 0.0
        %1081 = vmatprep.subr.mxu0 0.0
        %1082 = vmatpush2.msra.mxu0 0.0
        %1083 = vmatprep.subr.mxu0 0.0
        %1084 = vmatpush2.msra.mxu0 0.0
        %1085 = vmatprep.subr.mxu0 0.0
        %1086 = vmatpush2.msra.mxu0 0.0
        %1087 = vmatprep.subr.mxu0 0.0
        %1088 = vmatpush2.msra.mxu0 0.0
        %1089 = vmatprep.subr.mxu0 0.0
        %1090 = vmatpush2.msra.mxu0 0.0
        %1091 = vmatprep.subr.mxu0 0.0
        %1092 = vmatpush2.msra.mxu0 0.0
        %1093 = vmatprep.subr.mxu0 0.0
        %1094 = vmatpush2.msra.mxu0 0.0
        %1095 = vmatprep.subr.mxu0 0.0
        %1096 = vmatpush2.msra.mxu0 0.0
        %1097 = vmatprep.subr.mxu0 0.0
        %1098 = vmatpush2.msra.mxu0 0.0
        %1099 = vmatprep.subr.mxu0 0.0
        %1100 = vmatpush2.msra.mxu0 0.0
        %1101 = vmatprep.subr.mxu0 0.0
        %1102 = vmatpush2.msra.mxu0 0.0
        %1103 = vmatprep.subr.mxu0 0.0
        %1104 = vmatpush2.msra.mxu0 0.0
        %1105 = vmatprep.subr.mxu0 0.0
        %1106 = vmatpush2.msra.mxu0 0.0
        %1107 = vmatprep.mubr.f32.mxu0 0.0
        %1108 = vmatmul.mubr.f32.gmra.mxu0 %v1038
        %v1109 = vpop.f32.mrf.mxu0
        %v1110 = vadd.f32 %v1035, %v1109
        %v1111 = vpop.f32.mrf.mxu0
        %1112 = vdwg.mxu0
        %v1113 = vadd.f32 %v1028, %v1110
        %v1114 = vmax.f32 %v1113, 0.0
        %v1115 = vld [vmem:[#allocation2 + $0xe] sm:$0x3]
        %v1116 = vld [vmem:[#allocation3 + $0xe] sm:$0x3]
        %vm1117 = vcmask 25600
        %1118 = vst.msk [vmem:[#allocation2 + $0x6] sm:$0x3] %vm1117, %v1115
        %vm1119 = vcmask 58368
        %1120 = vst.msk [vmem:[#allocation3 + $0x6] sm:$0x3] %vm1119, %v1116
        %1121 = vst.msk [vmem:[%s522] sm:$0xff] %vm790, %v1114
        // Predicated region
        $region89: #{encoder_forward.1} parent=63 // pred_check
          %p1122 = pneg %p532
        $region90: #{encoder_forward.1} parent=63 // pred_check_branch
          %1124 = sbr.rel (%p1122) target = $region92
        $region91: #{encoder_forward.1} parent=63 // pred_region
          %vm1125 = vcmask 60416
          %1126 = vst.msk [vmem:[#allocation4 + $0x4] sm:$0xf] %vm1125, 0.0
          %1127 = vst.msk [vmem:[#allocation5 + $0x4] sm:$0xf] %vm1125, 0.0
        $region92: #{encoder_forward.1} parent=63 // pred_fallthru
          _
        %1128 = vst.msk [vmem:[#allocation4 + $0x8] sm:$0xff] %vm790, %v1114
        %v1129 = vld [vmem:[%s8] sm:$0x1]
        %v1130 = vld [vmem:[#allocation4 + $0x4] sm:$0xff]
        %v1131 = vld [vmem:[%s7] sm:$0xff]
        %v1133 = vsel %vm790, %v1130, 0
        %1135 = vmatprep.subr.mxu0 0.0
        %1136 = vmatpush1.msra.mxu0 0.0
        %1137 = vmatprep.subr.mxu0 0.0
        %1138 = vmatpush1.msra.mxu0 0.0
        %1139 = vmatprep.subr.mxu0 0.0
        %1140 = vmatpush1.msra.mxu0 0.0
        %1141 = vmatprep.subr.mxu0 0.0
        %1142 = vmatpush1.msra.mxu0 0.0
        %1143 = vmatprep.subr.mxu0 0.0
        %1144 = vmatpush1.msra.mxu0 0.0
        %1145 = vmatprep.subr.mxu0 0.0
        %1146 = vmatpush1.msra.mxu0 0.0
        %1147 = vmatprep.subr.mxu0 0.0
        %1148 = vmatpush1.msra.mxu0 0.0
        %1149 = vmatprep.subr.mxu0 0.0
        %1150 = vmatpush1.msra.mxu0 0.0
        %1151 = vmatprep.subr.mxu0 0.0
        %1152 = vmatpush1.msra.mxu0 0.0
        %1153 = vmatprep.subr.mxu0 0.0
        %1154 = vmatpush1.msra.mxu0 0.0
        %1155 = vmatprep.subr.mxu0 0.0
        %1156 = vmatpush1.msra.mxu0 0.0
        %1157 = vmatprep.subr.mxu0 0.0
        %1158 = vmatpush1.msra.mxu0 0.0
        %1159 = vmatprep.subr.mxu0 0.0
        %1160 = vmatpush1.msra.mxu0 0.0
        %1161 = vmatprep.subr.mxu0 0.0
        %1162 = vmatpush1.msra.mxu0 0.0
        %1163 = vmatprep.subr.mxu0 0.0
        %1164 = vmatpush1.msra.mxu0 0.0
        %1165 = vmatprep.subr.mxu0 0.0
        %1166 = vmatpush1.msra.mxu0 %v1131
        %1167 = vmatprep.subr.mxu0 0.0
        %1168 = vmatpush2.msra.mxu0 0.0
        %1169 = vmatprep.subr.mxu0 0.0
        %1170 = vmatpush2.msra.mxu0 0.0
        %1171 = vmatprep.subr.mxu0 0.0
        %1172 = vmatpush2.msra.mxu0 0.0
        %1173 = vmatprep.subr.mxu0 0.0
        %1174 = vmatpush2.msra.mxu0 0.0
        %1175 = vmatprep.subr.mxu0 0.0
        %1176 = vmatpush2.msra.mxu0 0.0
        %1177 = vmatprep.subr.mxu0 0.0
        %1178 = vmatpush2.msra.mxu0 0.0
        %1179 = vmatprep.subr.mxu0 0.0
        %1180 = vmatpush2.msra.mxu0 0.0
        %1181 = vmatprep.subr.mxu0 0.0
        %1182 = vmatpush2.msra.mxu0 0.0
        %1183 = vmatprep.subr.mxu0 0.0
        %1184 = vmatpush2.msra.mxu0 0.0
        %1185 = vmatprep.subr.mxu0 0.0
        %1186 = vmatpush2.msra.mxu0 0.0
        %1187 = vmatprep.subr.mxu0 0.0
        %1188 = vmatpush2.msra.mxu0 0.0
        %1189 = vmatprep.subr.mxu0 0.0
        %1190 = vmatpush2.msra.mxu0 0.0
        %1191 = vmatprep.subr.mxu0 0.0
        %1192 = vmatpush2.msra.mxu0 0.0
        %1193 = vmatprep.subr.mxu0 0.0
        %1194 = vmatpush2.msra.mxu0 0.0
        %1195 = vmatprep.subr.mxu0 0.0
        %1196 = vmatpush2.msra.mxu0 0.0
        %1197 = vmatprep.subr.mxu0 0.0
        %1198 = vmatpush2.msra.mxu0 0.0
        %1199 = vmatprep.mubr.f32.mxu0 0.0
        %1200 = vmatmul.mubr.f32.gmra.mxu0 %v1133
        %v1201 = vpop.f32.mrf.mxu0
        %v1202 = vadd.f32 0.0, %v1201
        %v1203 = vpop.f32.mrf.mxu0
        %1204 = vdwg.mxu0
        %v1206 = vlaneseq
        %v1207 = vshrl.u32 %v1206, 7
        %v1208 = vsub.s32 0, %v1207
        %v1209 = vrot.slane %v1129, %v1208
        %v1211 = vadd.f32 %v1209, %v1202
        %v1212 = vld [vmem:[#allocation4 + $0x6] sm:$0xff]
        %s1213 = scalar_lea.vmem %s7, 8
        %v1214 = vld [vmem:[%s1213] sm:$0xff]
        %v1216 = vsel %vm790, %v1212, 0
        %1218 = vmatprep.subr.mxu0 0.0
        %1219 = vmatpush1.msra.mxu0 0.0
        %1220 = vmatprep.subr.mxu0 0.0
        %1221 = vmatpush1.msra.mxu0 0.0
        %1222 = vmatprep.subr.mxu0 0.0
        %1223 = vmatpush1.msra.mxu0 0.0
        %1224 = vmatprep.subr.mxu0 0.0
        %1225 = vmatpush1.msra.mxu0 0.0
        %1226 = vmatprep.subr.mxu0 0.0
        %1227 = vmatpush1.msra.mxu0 0.0
        %1228 = vmatprep.subr.mxu0 0.0
        %1229 = vmatpush1.msra.mxu0 0.0
        %1230 = vmatprep.subr.mxu0 0.0
        %1231 = vmatpush1.msra.mxu0 0.0
        %1232 = vmatprep.subr.mxu0 0.0
        %1233 = vmatpush1.msra.mxu0 0.0
        %1234 = vmatprep.subr.mxu0 0.0
        %1235 = vmatpush1.msra.mxu0 0.0
        %1236 = vmatprep.subr.mxu0 0.0
        %1237 = vmatpush1.msra.mxu0 0.0
        %1238 = vmatprep.subr.mxu0 0.0
        %1239 = vmatpush1.msra.mxu0 0.0
        %1240 = vmatprep.subr.mxu0 0.0
        %1241 = vmatpush1.msra.mxu0 0.0
        %1242 = vmatprep.subr.mxu0 0.0
        %1243 = vmatpush1.msra.mxu0 0.0
        %1244 = vmatprep.subr.mxu0 0.0
        %1245 = vmatpush1.msra.mxu0 0.0
        %1246 = vmatprep.subr.mxu0 0.0
        %1247 = vmatpush1.msra.mxu0 0.0
        %1248 = vmatprep.subr.mxu0 0.0
        %1249 = vmatpush1.msra.mxu0 %v1214
        %1250 = vmatprep.subr.mxu0 0.0
        %1251 = vmatpush2.msra.mxu0 0.0
        %1252 = vmatprep.subr.mxu0 0.0
        %1253 = vmatpush2.msra.mxu0 0.0
        %1254 = vmatprep.subr.mxu0 0.0
        %1255 = vmatpush2.msra.mxu0 0.0
        %1256 = vmatprep.subr.mxu0 0.0
        %1257 = vmatpush2.msra.mxu0 0.0
        %1258 = vmatprep.subr.mxu0 0.0
        %1259 = vmatpush2.msra.mxu0 0.0
        %1260 = vmatprep.subr.mxu0 0.0
        %1261 = vmatpush2.msra.mxu0 0.0
        %1262 = vmatprep.subr.mxu0 0.0
        %1263 = vmatpush2.msra.mxu0 0.0
        %1264 = vmatprep.subr.mxu0 0.0
        %1265 = vmatpush2.msra.mxu0 0.0
        %1266 = vmatprep.subr.mxu0 0.0
        %1267 = vmatpush2.msra.mxu0 0.0
        %1268 = vmatprep.subr.mxu0 0.0
        %1269 = vmatpush2.msra.mxu0 0.0
        %1270 = vmatprep.subr.mxu0 0.0
        %1271 = vmatpush2.msra.mxu0 0.0
        %1272 = vmatprep.subr.mxu0 0.0
        %1273 = vmatpush2.msra.mxu0 0.0
        %1274 = vmatprep.subr.mxu0 0.0
        %1275 = vmatpush2.msra.mxu0 0.0
        %1276 = vmatprep.subr.mxu0 0.0
        %1277 = vmatpush2.msra.mxu0 0.0
        %1278 = vmatprep.subr.mxu0 0.0
        %1279 = vmatpush2.msra.mxu0 0.0
        %1280 = vmatprep.subr.mxu0 0.0
        %1281 = vmatpush2.msra.mxu0 0.0
        %1282 = vmatprep.mubr.f32.mxu0 0.0
        %1283 = vmatmul.mubr.f32.gmra.mxu0 %v1216
        %v1284 = vpop.f32.mrf.mxu0
        %v1285 = vadd.f32 0.0, %v1284
        %v1286 = vpop.f32.mrf.mxu0
        %1287 = vdwg.mxu0
        %v1288 = vadd.f32 %v1211, %v1285
        %v1289 = vld [vmem:[#allocation4 + $0x8] sm:$0xff]
        %s1290 = scalar_lea.vmem %s7, 16
        %v1291 = vld [vmem:[%s1290] sm:$0xff]
        %v1293 = vsel %vm790, %v1289, 0
        %1295 = vmatprep.subr.mxu0 0.0
        %1296 = vmatpush1.msra.mxu0 0.0
        %1297 = vmatprep.subr.mxu0 0.0
        %1298 = vmatpush1.msra.mxu0 0.0
        %1299 = vmatprep.subr.mxu0 0.0
        %1300 = vmatpush1.msra.mxu0 0.0
        %1301 = vmatprep.subr.mxu0 0.0
        %1302 = vmatpush1.msra.mxu0 0.0
        %1303 = vmatprep.subr.mxu0 0.0
        %1304 = vmatpush1.msra.mxu0 0.0
        %1305 = vmatprep.subr.mxu0 0.0
        %1306 = vmatpush1.msra.mxu0 0.0
        %1307 = vmatprep.subr.mxu0 0.0
        %1308 = vmatpush1.msra.mxu0 0.0
        %1309 = vmatprep.subr.mxu0 0.0
        %1310 = vmatpush1.msra.mxu0 0.0
        %1311 = vmatprep.subr.mxu0 0.0
        %1312 = vmatpush1.msra.mxu0 0.0
        %1313 = vmatprep.subr.mxu0 0.0
        %1314 = vmatpush1.msra.mxu0 0.0
        %1315 = vmatprep.subr.mxu0 0.0
        %1316 = vmatpush1.msra.mxu0 0.0
        %1317 = vmatprep.subr.mxu0 0.0
        %1318 = vmatpush1.msra.mxu0 0.0
        %1319 = vmatprep.subr.mxu0 0.0
        %1320 = vmatpush1.msra.mxu0 0.0
        %1321 = vmatprep.subr.mxu0 0.0
        %1322 = vmatpush1.msra.mxu0 0.0
        %1323 = vmatprep.subr.mxu0 0.0
        %1324 = vmatpush1.msra.mxu0 0.0
        %1325 = vmatprep.subr.mxu0 0.0
        %1326 = vmatpush1.msra.mxu0 %v1291
        %1327 = vmatprep.subr.mxu0 0.0
        %1328 = vmatpush2.msra.mxu0 0.0
        %1329 = vmatprep.subr.mxu0 0.0
        %1330 = vmatpush2.msra.mxu0 0.0
        %1331 = vmatprep.subr.mxu0 0.0
        %1332 = vmatpush2.msra.mxu0 0.0
        %1333 = vmatprep.subr.mxu0 0.0
        %1334 = vmatpush2.msra.mxu0 0.0
        %1335 = vmatprep.subr.mxu0 0.0
        %1336 = vmatpush2.msra.mxu0 0.0
        %1337 = vmatprep.subr.mxu0 0.0
        %1338 = vmatpush2.msra.mxu0 0.0
        %1339 = vmatprep.subr.mxu0 0.0
        %1340 = vmatpush2.msra.mxu0 0.0
        %1341 = vmatprep.subr.mxu0 0.0
        %1342 = vmatpush2.msra.mxu0 0.0
        %1343 = vmatprep.subr.mxu0 0.0
        %1344 = vmatpush2.msra.mxu0 0.0
        %1345 = vmatprep.subr.mxu0 0.0
        %1346 = vmatpush2.msra.mxu0 0.0
        %1347 = vmatprep.subr.mxu0 0.0
        %1348 = vmatpush2.msra.mxu0 0.0
        %1349 = vmatprep.subr.mxu0 0.0
        %1350 = vmatpush2.msra.mxu0 0.0
        %1351 = vmatprep.subr.mxu0 0.0
        %1352 = vmatpush2.msra.mxu0 0.0
        %1353 = vmatprep.subr.mxu0 0.0
        %1354 = vmatpush2.msra.mxu0 0.0
        %1355 = vmatprep.subr.mxu0 0.0
        %1356 = vmatpush2.msra.mxu0 0.0
        %1357 = vmatprep.subr.mxu0 0.0
        %1358 = vmatpush2.msra.mxu0 0.0
        %1359 = vmatprep.mubr.f32.mxu0 0.0
        %1360 = vmatmul.mubr.f32.gmra.mxu0 %v1293
        %v1361 = vpop.f32.mrf.mxu0
        %v1362 = vadd.f32 0.0, %v1361
        %v1363 = vpop.f32.mrf.mxu0
        %1364 = vdwg.mxu0
        %v1365 = vadd.f32 %v1288, %v1362
        %v1366 = vmax.f32 %v1365, 0.0
        %1367 = vst.msk [vmem:[#allocation5 + $0x8] sm:$0xff] %vm790, %v1366
        %v1368 = vld [vmem:[%s10] sm:$0x1]
        %v1369 = vld [vmem:[#allocation5 + $0x4] sm:$0xff]
        %v1370 = vld [vmem:[#allocation13] sm:$0xff]
        %v1372 = vsel %vm790, %v1369, 0
        %1374 = vmatprep.subr.mxu0 0.0
        %1375 = vmatpush1.msra.mxu0 0.0
        %1376 = vmatprep.subr.mxu0 0.0
        %1377 = vmatpush1.msra.mxu0 0.0
        %1378 = vmatprep.subr.mxu0 0.0
        %1379 = vmatpush1.msra.mxu0 0.0
        %1380 = vmatprep.subr.mxu0 0.0
        %1381 = vmatpush1.msra.mxu0 0.0
        %1382 = vmatprep.subr.mxu0 0.0
        %1383 = vmatpush1.msra.mxu0 0.0
        %1384 = vmatprep.subr.mxu0 0.0
        %1385 = vmatpush1.msra.mxu0 0.0
        %1386 = vmatprep.subr.mxu0 0.0
        %1387 = vmatpush1.msra.mxu0 0.0
        %1388 = vmatprep.subr.mxu0 0.0
        %1389 = vmatpush1.msra.mxu0 0.0
        %1390 = vmatprep.subr.mxu0 0.0
        %1391 = vmatpush1.msra.mxu0 0.0
        %1392 = vmatprep.subr.mxu0 0.0
        %1393 = vmatpush1.msra.mxu0 0.0
        %1394 = vmatprep.subr.mxu0 0.0
        %1395 = vmatpush1.msra.mxu0 0.0
        %1396 = vmatprep.subr.mxu0 0.0
        %1397 = vmatpush1.msra.mxu0 0.0
        %1398 = vmatprep.subr.mxu0 0.0
        %1399 = vmatpush1.msra.mxu0 0.0
        %1400 = vmatprep.subr.mxu0 0.0
        %1401 = vmatpush1.msra.mxu0 0.0
        %1402 = vmatprep.subr.mxu0 0.0
        %1403 = vmatpush1.msra.mxu0 0.0
        %1404 = vmatprep.subr.mxu0 0.0
        %1405 = vmatpush1.msra.mxu0 %v1370
        %1406 = vmatprep.subr.mxu0 0.0
        %1407 = vmatpush2.msra.mxu0 0.0
        %1408 = vmatprep.subr.mxu0 0.0
        %1409 = vmatpush2.msra.mxu0 0.0
        %1410 = vmatprep.subr.mxu0 0.0
        %1411 = vmatpush2.msra.mxu0 0.0
        %1412 = vmatprep.subr.mxu0 0.0
        %1413 = vmatpush2.msra.mxu0 0.0
        %1414 = vmatprep.subr.mxu0 0.0
        %1415 = vmatpush2.msra.mxu0 0.0
        %1416 = vmatprep.subr.mxu0 0.0
        %1417 = vmatpush2.msra.mxu0 0.0
        %1418 = vmatprep.subr.mxu0 0.0
        %1419 = vmatpush2.msra.mxu0 0.0
        %1420 = vmatprep.subr.mxu0 0.0
        %1421 = vmatpush2.msra.mxu0 0.0
        %1422 = vmatprep.subr.mxu0 0.0
        %1423 = vmatpush2.msra.mxu0 0.0
        %1424 = vmatprep.subr.mxu0 0.0
        %1425 = vmatpush2.msra.mxu0 0.0
        %1426 = vmatprep.subr.mxu0 0.0
        %1427 = vmatpush2.msra.mxu0 0.0
        %1428 = vmatprep.subr.mxu0 0.0
        %1429 = vmatpush2.msra.mxu0 0.0
        %1430 = vmatprep.subr.mxu0 0.0
        %1431 = vmatpush2.msra.mxu0 0.0
        %1432 = vmatprep.subr.mxu0 0.0
        %1433 = vmatpush2.msra.mxu0 0.0
        %1434 = vmatprep.subr.mxu0 0.0
        %1435 = vmatpush2.msra.mxu0 0.0
        %1436 = vmatprep.subr.mxu0 0.0
        %1437 = vmatpush2.msra.mxu0 0.0
        %1438 = vmatprep.mubr.f32.mxu0 0.0
        %1439 = vmatmul.mubr.f32.gmra.mxu0 %v1372
        %v1440 = vpop.f32.mrf.mxu0
        %v1441 = vadd.f32 0.0, %v1440
        %v1442 = vpop.f32.mrf.mxu0
        %1443 = vdwg.mxu0
        %v1445 = vlaneseq
        %v1446 = vshrl.u32 %v1445, 7
        %v1447 = vsub.s32 0, %v1446
        %v1448 = vrot.slane %v1368, %v1447
        %v1450 = vadd.f32 %v1448, %v1441
        %v1451 = vld [vmem:[#allocation5 + $0x6] sm:$0xff]
        %s1452 = scalar_lea.vmem [#allocation13], 8
        %v1453 = vld [vmem:[%s1452] sm:$0xff]
        %v1455 = vsel %vm790, %v1451, 0
        %1457 = vmatprep.subr.mxu0 0.0
        %1458 = vmatpush1.msra.mxu0 0.0
        %1459 = vmatprep.subr.mxu0 0.0
        %1460 = vmatpush1.msra.mxu0 0.0
        %1461 = vmatprep.subr.mxu0 0.0
        %1462 = vmatpush1.msra.mxu0 0.0
        %1463 = vmatprep.subr.mxu0 0.0
        %1464 = vmatpush1.msra.mxu0 0.0
        %1465 = vmatprep.subr.mxu0 0.0
        %1466 = vmatpush1.msra.mxu0 0.0
        %1467 = vmatprep.subr.mxu0 0.0
        %1468 = vmatpush1.msra.mxu0 0.0
        %1469 = vmatprep.subr.mxu0 0.0
        %1470 = vmatpush1.msra.mxu0 0.0
        %1471 = vmatprep.subr.mxu0 0.0
        %1472 = vmatpush1.msra.mxu0 0.0
        %1473 = vmatprep.subr.mxu0 0.0
        %1474 = vmatpush1.msra.mxu0 0.0
        %1475 = vmatprep.subr.mxu0 0.0
        %1476 = vmatpush1.msra.mxu0 0.0
        %1477 = vmatprep.subr.mxu0 0.0
        %1478 = vmatpush1.msra.mxu0 0.0
        %1479 = vmatprep.subr.mxu0 0.0
        %1480 = vmatpush1.msra.mxu0 0.0
        %1481 = vmatprep.subr.mxu0 0.0
        %1482 = vmatpush1.msra.mxu0 0.0
        %1483 = vmatprep.subr.mxu0 0.0
        %1484 = vmatpush1.msra.mxu0 0.0
        %1485 = vmatprep.subr.mxu0 0.0
        %1486 = vmatpush1.msra.mxu0 0.0
        %1487 = vmatprep.subr.mxu0 0.0
        %1488 = vmatpush1.msra.mxu0 %v1453
        %1489 = vmatprep.subr.mxu0 0.0
        %1490 = vmatpush2.msra.mxu0 0.0
        %1491 = vmatprep.subr.mxu0 0.0
        %1492 = vmatpush2.msra.mxu0 0.0
        %1493 = vmatprep.subr.mxu0 0.0
        %1494 = vmatpush2.msra.mxu0 0.0
        %1495 = vmatprep.subr.mxu0 0.0
        %1496 = vmatpush2.msra.mxu0 0.0
        %1497 = vmatprep.subr.mxu0 0.0
        %1498 = vmatpush2.msra.mxu0 0.0
        %1499 = vmatprep.subr.mxu0 0.0
        %1500 = vmatpush2.msra.mxu0 0.0
        %1501 = vmatprep.subr.mxu0 0.0
        %1502 = vmatpush2.msra.mxu0 0.0
        %1503 = vmatprep.subr.mxu0 0.0
        %1504 = vmatpush2.msra.mxu0 0.0
        %1505 = vmatprep.subr.mxu0 0.0
        %1506 = vmatpush2.msra.mxu0 0.0
        %1507 = vmatprep.subr.mxu0 0.0
        %1508 = vmatpush2.msra.mxu0 0.0
        %1509 = vmatprep.subr.mxu0 0.0
        %1510 = vmatpush2.msra.mxu0 0.0
        %1511 = vmatprep.subr.mxu0 0.0
        %1512 = vmatpush2.msra.mxu0 0.0
        %1513 = vmatprep.subr.mxu0 0.0
        %1514 = vmatpush2.msra.mxu0 0.0
        %1515 = vmatprep.subr.mxu0 0.0
        %1516 = vmatpush2.msra.mxu0 0.0
        %1517 = vmatprep.subr.mxu0 0.0
        %1518 = vmatpush2.msra.mxu0 0.0
        %1519 = vmatprep.subr.mxu0 0.0
        %1520 = vmatpush2.msra.mxu0 0.0
        %1521 = vmatprep.mubr.f32.mxu0 0.0
        %1522 = vmatmul.mubr.f32.gmra.mxu0 %v1455
        %v1523 = vpop.f32.mrf.mxu0
        %v1524 = vadd.f32 0.0, %v1523
        %v1525 = vpop.f32.mrf.mxu0
        %1526 = vdwg.mxu0
        %v1527 = vadd.f32 %v1450, %v1524
        %v1528 = vld [vmem:[#allocation5 + $0x8] sm:$0xff]
        %s1529 = scalar_lea.vmem [#allocation13], 16
        %v1530 = vld [vmem:[%s1529] sm:$0xff]
        %v1532 = vsel %vm790, %v1528, 0
        %1534 = vmatprep.subr.mxu0 0.0
        %1535 = vmatpush1.msra.mxu0 0.0
        %1536 = vmatprep.subr.mxu0 0.0
        %1537 = vmatpush1.msra.mxu0 0.0
        %1538 = vmatprep.subr.mxu0 0.0
        %1539 = vmatpush1.msra.mxu0 0.0
        %1540 = vmatprep.subr.mxu0 0.0
        %1541 = vmatpush1.msra.mxu0 0.0
        %1542 = vmatprep.subr.mxu0 0.0
        %1543 = vmatpush1.msra.mxu0 0.0
        %1544 = vmatprep.subr.mxu0 0.0
        %1545 = vmatpush1.msra.mxu0 0.0
        %1546 = vmatprep.subr.mxu0 0.0
        %1547 = vmatpush1.msra.mxu0 0.0
        %1548 = vmatprep.subr.mxu0 0.0
        %1549 = vmatpush1.msra.mxu0 0.0
        %1550 = vmatprep.subr.mxu0 0.0
        %1551 = vmatpush1.msra.mxu0 0.0
        %1552 = vmatprep.subr.mxu0 0.0
        %1553 = vmatpush1.msra.mxu0 0.0
        %1554 = vmatprep.subr.mxu0 0.0
        %1555 = vmatpush1.msra.mxu0 0.0
        %1556 = vmatprep.subr.mxu0 0.0
        %1557 = vmatpush1.msra.mxu0 0.0
        %1558 = vmatprep.subr.mxu0 0.0
        %1559 = vmatpush1.msra.mxu0 0.0
        %1560 = vmatprep.subr.mxu0 0.0
        %1561 = vmatpush1.msra.mxu0 0.0
        %1562 = vmatprep.subr.mxu0 0.0
        %1563 = vmatpush1.msra.mxu0 0.0
        %1564 = vmatprep.subr.mxu0 0.0
        %1565 = vmatpush1.msra.mxu0 %v1530
        %1566 = vmatprep.subr.mxu0 0.0
        %1567 = vmatpush2.msra.mxu0 0.0
        %1568 = vmatprep.subr.mxu0 0.0
        %1569 = vmatpush2.msra.mxu0 0.0
        %1570 = vmatprep.subr.mxu0 0.0
        %1571 = vmatpush2.msra.mxu0 0.0
        %1572 = vmatprep.subr.mxu0 0.0
        %1573 = vmatpush2.msra.mxu0 0.0
        %1574 = vmatprep.subr.mxu0 0.0
        %1575 = vmatpush2.msra.mxu0 0.0
        %1576 = vmatprep.subr.mxu0 0.0
        %1577 = vmatpush2.msra.mxu0 0.0
        %1578 = vmatprep.subr.mxu0 0.0
        %1579 = vmatpush2.msra.mxu0 0.0
        %1580 = vmatprep.subr.mxu0 0.0
        %1581 = vmatpush2.msra.mxu0 0.0
        %1582 = vmatprep.subr.mxu0 0.0
        %1583 = vmatpush2.msra.mxu0 0.0
        %1584 = vmatprep.subr.mxu0 0.0
        %1585 = vmatpush2.msra.mxu0 0.0
        %1586 = vmatprep.subr.mxu0 0.0
        %1587 = vmatpush2.msra.mxu0 0.0
        %1588 = vmatprep.subr.mxu0 0.0
        %1589 = vmatpush2.msra.mxu0 0.0
        %1590 = vmatprep.subr.mxu0 0.0
        %1591 = vmatpush2.msra.mxu0 0.0
        %1592 = vmatprep.subr.mxu0 0.0
        %1593 = vmatpush2.msra.mxu0 0.0
        %1594 = vmatprep.subr.mxu0 0.0
        %1595 = vmatpush2.msra.mxu0 0.0
        %1596 = vmatprep.subr.mxu0 0.0
        %1597 = vmatpush2.msra.mxu0 0.0
        %1598 = vmatprep.mubr.f32.mxu0 0.0
        %1599 = vmatmul.mubr.f32.gmra.mxu0 %v1532
        %v1600 = vpop.f32.mrf.mxu0
        %v1601 = vadd.f32 0.0, %v1600
        %v1602 = vpop.f32.mrf.mxu0
        %1603 = vdwg.mxu0
        %v1604 = vadd.f32 %v1527, %v1601
        %v1605 = vadd.f32 %v1604, %v1114
        %v1606 = vmax.f32 %v1605, 0.0
        %v1607 = vld [vmem:[#allocation4 + $0xc] sm:$0xf]
        %v1608 = vld [vmem:[#allocation5 + $0xc] sm:$0xf]
        %vm1609 = vcmask 60416
        %1610 = vst.msk [vmem:[#allocation4 + $0x4] sm:$0xf] %vm1609, %v1607
        %1611 = vst.msk [vmem:[#allocation5 + $0x4] sm:$0xf] %vm1609, %v1608
        %1612 = vst.msk [vmem:[%s530] sm:$0xff] %vm790, %v1606
        %p1613 = scmp.lt.s32.totalorder %s31, 1
        %s1614 = scalar_select %p1613, %s31, 1
        %p1615 = scmp.lt.s32.totalorder %s32, 1
        %s1616 = scalar_select %p1615, %s32, 1
        %s1617 = smul.addr %s1614, 2
        %s1618 = sadd.s32 %s1616, %s1617
        %s1619 = smul.addr %s1618, 8
        %s1620 = scalar_lea.vmem %s11, %s1619
        %p1621 = scmp.lt.s32.totalorder %s31, 1
        %s1622 = scalar_select %p1621, %s31, 1
        %p1623 = scmp.lt.s32.totalorder %s32, 1
        %s1624 = scalar_select %p1623, %s32, 1
        %s1625 = smul.addr %s1622, 2
        %s1626 = sadd.s32 %s1624, %s1625
        %s1627 = smul.addr %s1626, 8
        %s1628 = scalar_lea.vmem %s12, %s1627
        // Predicated region
        $region93: #{encoder_forward.1} parent=63 // pred_check
          %p1629 = pneg %p297
        $region94: #{encoder_forward.1} parent=63 // pred_check_branch
          %1631 = sbr.rel (%p1629) target = $region96
        $region95: #{encoder_forward.1} parent=63 // pred_region
          _
        $region96: #{encoder_forward.1} parent=63 // pred_fallthru
          _
        // Predicated region
        $region97: #{encoder_forward.1} parent=63 // pred_check
          %p1632 = pneg %p325
        $region98: #{encoder_forward.1} parent=63 // pred_check_branch
          %1634 = sbr.rel (%p1632) target = $region100
        $region99: #{encoder_forward.1} parent=63 // pred_region
          _
        $region100: #{encoder_forward.1} parent=63 // pred_fallthru
          _
      $region64: #{encoder_forward.1} parent=5 // pred_fallthru
        _
      %p1635 = scmp.le.s32.totalorder 2, %s22
      // Predicated region
      $region101: #{encoder_forward.1} parent=5 // pred_check
        %p1636 = pneg %p1635
      $region102: #{encoder_forward.1} parent=5 // pred_check_branch
        %1638 = sbr.rel (%p1636) target = $region104
      $region103: #{encoder_forward.1} parent=5 // pred_region
        %s1639 = ssub.s32 %s22, 2
        // Predicated region
        $region105: #{encoder_forward.1} parent=103 // pred_check
          %p1640 = pneg %p303
        $region106: #{encoder_forward.1} parent=103 // pred_check_branch
          %1642 = sbr.rel (%p1640) target = $region108
        $region107: #{encoder_forward.1} parent=103 // pred_region
          %p1643 = scmp.lt.s32.totalorder %s33, 1
          %s1644 = scalar_select %p1643, %s33, 1
          %p1645 = scmp.lt.s32.totalorder %s34, 1
          %s1646 = scalar_select %p1645, %s34, 1
          %s1647 = smul.addr %s1644, 2
          %s1648 = sadd.s32 %s1646, %s1647
          %s1649 = smul.addr %s1648, 8
          %s1650 = scalar_lea.vmem %s11, %s1649
        $region108: #{encoder_forward.1} parent=103 // pred_fallthru
          _
        // Predicated region
        $region109: #{encoder_forward.1} parent=103 // pred_check
          %p1651 = pneg %p331
        $region110: #{encoder_forward.1} parent=103 // pred_check_branch
          %1653 = sbr.rel (%p1651) target = $region112
        $region111: #{encoder_forward.1} parent=103 // pred_region
          %p1654 = scmp.lt.s32.totalorder %s33, 1
          %s1655 = scalar_select %p1654, %s33, 1
          %p1656 = scmp.lt.s32.totalorder %s34, 1
          %s1657 = scalar_select %p1656, %s34, 1
          %s1658 = smul.addr %s1655, 2
          %s1659 = sadd.s32 %s1657, %s1658
          %s1660 = smul.addr %s1659, 8
          %s1661 = scalar_lea.vmem %s12, %s1660
        $region112: #{encoder_forward.1} parent=103 // pred_fallthru
          _
      $region104: #{encoder_forward.1} parent=5 // pred_fallthru
        _
    $region6: #{encoder_forward.1} parent=1 // loop_footer
      %s26 = sadd.s32 1, %s22
    $region7: #{encoder_forward.1} parent=1 // loop_footer_branch
      %21 = sbr.rel target = $region3
    $region8: #{encoder_forward.1} parent=1 // loop_exit
      _
    %1662 = vsyncpa [#allocation7], 1
    %s1663 = scalar_lea.sflag [#allocation7], 1
    %1664 = vsyncpa %s1663, 1
    %1665 = vsyncpa [#allocation9], 1
    %1666 = vsyncpa [#allocation12], 1

</llo_original>
